<compile_context>
chip_gen: v5e
topology: v5e:2x2
jax: 0.10.0
libtpu: 0.0.40
codegen_flags: <defaults>
</compile_context>

<pallas_src>
import math
import functools

import jax
import jax.numpy as jnp
import numpy as np
from jax.experimental import pallas as pl
from jax.experimental.pallas import tpu as pltpu

LANE = 128
_VMEM_LIMIT = 64 * 1024 * 1024


def _round_up(x, m):
    return ((x + m - 1) // m) * m


def _pick_tile(m, cap):
    # Full-dim block when small (always legal), else a multiple-of-8 cap.
    return m if m <= cap else cap


def _cparams(n_grid_dims):
    return pltpu.CompilerParams(
        dimension_semantics=("parallel",) * n_grid_dims,
        vmem_limit_bytes=_VMEM_LIMIT)


# ---------------------------------------------------------------------------
# Kernel 1: conv1 (Cin=1, 3x3 stride 2) + bias + ReLU as 9 VPU broadcast FMAs
#   patches: (M, 9) f32   w: (9, Cp) f32   b: (1, Cp) f32  ->  (M, Cp) bf16
# ---------------------------------------------------------------------------
def _conv1_kernel(p_ref, w_ref, b_ref, o_ref):
    p = p_ref[...]                       # (tm, 9)
    w = w_ref[...]                       # (9, Cp)
    acc = p[:, 0:1] * w[0:1, :]          # (tm, Cp) via lane/sublane broadcast
    for t in range(1, 9):
        acc = acc + p[:, t:t + 1] * w[t:t + 1, :]
    acc = jnp.maximum(acc + b_ref[...], 0.0)
    o_ref[...] = acc.astype(o_ref.dtype)


def conv1_pallas(patches, w, b, *, tm_cap=256):
    M, K = patches.shape
    _, N = w.shape
    tm = _pick_tile(M, tm_cap)
    return pl.pallas_call(
        _conv1_kernel,
        out_shape=jax.ShapeDtypeStruct((M, N), jnp.bfloat16),
        grid=(pl.cdiv(M, tm),),
        in_specs=[
            pl.BlockSpec((tm, K), lambda i: (i, 0)),
            pl.BlockSpec((K, N), lambda i: (0, 0)),
            pl.BlockSpec((1, N), lambda i: (0, 0)),
        ],
        out_specs=pl.BlockSpec((tm, N), lambda i: (i, 0)),
        compiler_params=_cparams(1),
    )(patches, w, b)


# ---------------------------------------------------------------------------
# Kernel 2: conv2 (3x3 stride 2) + bias + ReLU as 9 accumulated MXU matmuls
#   taps: 9 x (M, Cp) bf16   w: (9, Cp, Cp) bf16   b: (1, Cp) f32
# ---------------------------------------------------------------------------
def _conv2_kernel(*refs):
    tap_refs = refs[:9]
    w_ref, b_ref, o_ref = refs[9], refs[10], refs[11]
    acc = jnp.dot(tap_refs[0][...], w_ref[0], preferred_element_type=jnp.float32)
    for t in range(1, 9):
        acc = acc + jnp.dot(tap_refs[t][...], w_ref[t],
                            preferred_element_type=jnp.float32)
    acc = jnp.maximum(acc + b_ref[...], 0.0)
    o_ref[...] = acc.astype(o_ref.dtype)


def conv2_pallas(taps, w, b, *, tm_cap=256):
    M, C = taps[0].shape
    _, _, N = w.shape
    tm = _pick_tile(M, tm_cap)
    tap_spec = pl.BlockSpec((tm, C), lambda i: (i, 0))
    return pl.pallas_call(
        _conv2_kernel,
        out_shape=jax.ShapeDtypeStruct((M, N), jnp.bfloat16),
        grid=(pl.cdiv(M, tm),),
        in_specs=[tap_spec] * 9 + [
            pl.BlockSpec((9, C, N), lambda i: (0, 0, 0)),
            pl.BlockSpec((1, N), lambda i: (0, 0)),
        ],
        out_specs=pl.BlockSpec((tm, N), lambda i: (i, 0)),
        compiler_params=_cparams(1),
    )(*taps, w, b)


# ---------------------------------------------------------------------------
# Kernel 3: Linear (sqrt(d_model) pre-folded) + positional-encoding add
#   x: (B, T, K) bf16   w: (K, Cp) bf16   b: (1, Cp) f32   pe: (T, Cp) f32
# ---------------------------------------------------------------------------
def _linear_pe_kernel(x_ref, w_ref, b_ref, pe_ref, o_ref):
    acc = jnp.dot(x_ref[...], w_ref[...], preferred_element_type=jnp.float32)
    o_ref[...] = (acc + b_ref[...] + pe_ref[...]).astype(o_ref.dtype)


def linear_pe_pallas(x3, w, b, pe, *, tt_cap=128):
    B, T, K = x3.shape
    _, N = w.shape
    tt = _pick_tile(T, tt_cap)
    return pl.pallas_call(
        _linear_pe_kernel,
        out_shape=jax.ShapeDtypeStruct((B, T, N), jnp.float32),
        grid=(B, pl.cdiv(T, tt)),
        in_specs=[
            pl.BlockSpec((None, tt, K), lambda b, i: (b, i, 0)),
            pl.BlockSpec((K, N), lambda b, i: (0, 0)),
            pl.BlockSpec((1, N), lambda b, i: (0, 0)),
            pl.BlockSpec((tt, N), lambda b, i: (i, 0)),
        ],
        out_specs=pl.BlockSpec((None, tt, N), lambda b, i: (b, i, 0)),
        compiler_params=_cparams(2),
    )(x3, w, b, pe)


# ---------------------------------------------------------------------------
# Glue: tap slices (strided views, plain JAX), parameter re-layout, forward
# ---------------------------------------------------------------------------
def _tap_slices_nhwc(h, Ho, Wo):
    """9 shifted stride-2 NHWC slices for a 3x3/s2 conv (no im2col stack)."""
    taps = []
    for ki in range(3):
        for kj in range(3):
            taps.append(h[:, ki:ki + 2 * Ho:2, kj:kj + 2 * Wo:2, :])
    return taps


def positional_encoding_table(d_model, max_len=5000):
    position = jnp.arange(max_len, dtype=jnp.float32)[:, None]
    div_term = jnp.exp(jnp.arange(0, d_model, 2, dtype=jnp.float32)
                       * (-math.log(10000.0) / d_model))
    pe = jnp.zeros((max_len, d_model), dtype=jnp.float32)
    pe = pe.at[:, 0::2].set(jnp.sin(position * div_term))
    pe = pe.at[:, 1::2].set(jnp.cos(position * div_term))
    return pe


def init_raw_params(idim, odim, key):
    """Random parameters in the exact PyTorch layouts."""
    ks = jax.random.split(key, 6)
    f_out = ((idim - 1) // 2 - 1) // 2
    return {
        "conv1_w": 0.1 * jax.random.normal(ks[0], (odim, 1, 3, 3), jnp.float32),
        "conv1_b": 0.1 * jax.random.normal(ks[1], (odim,), jnp.float32),
        "conv2_w": 0.05 * jax.random.normal(ks[2], (odim, odim, 3, 3), jnp.float32),
        "conv2_b": 0.1 * jax.random.normal(ks[3], (odim,), jnp.float32),
        # torch Linear weight is (out_features, in_features = odim * f_out)
        "lin_w": 0.05 * jax.random.normal(ks[4], (odim, odim * f_out), jnp.float32),
        "lin_b": 0.1 * jax.random.normal(ks[5], (odim,), jnp.float32),
    }


def prepare_params(raw, idim, odim, max_len=5000):
    """One-time offline re-layout: tap-major conv weights, f-major/c-minor
    Linear columns (NHWC flatten), channels zero-padded to a multiple of 128,
    sqrt(d_model) folded into the Linear weight/bias, bf16 MXU operands."""
    Cp = _round_up(odim, LANE)
    pc = Cp - odim
    F = ((idim - 1) // 2 - 1) // 2
    xscale = math.sqrt(odim)

    # conv1: (odim,1,3,3) -> (9, Cp) f32; row t = 3*ki+kj
    w1 = jnp.pad(raw["conv1_w"].reshape(odim, 9).T, ((0, 0), (0, pc)))
    b1 = jnp.pad(raw["conv1_b"], (0, pc)).reshape(1, Cp)

    # conv2: (odim,odim,3,3) -> (9, Cp, Cp) bf16; w2[3*ki+kj, cin, cout]
    w2 = jnp.transpose(raw["conv2_w"], (2, 3, 1, 0)).reshape(9, odim, odim)
    w2 = jnp.pad(w2, ((0, 0), (0, pc), (0, pc))).astype(jnp.bfloat16)
    b2 = jnp.pad(raw["conv2_b"], (0, pc)).reshape(1, Cp)

    # Linear: torch columns c*F+f  ->  rows f*Cp+c to match NHWC flattening
    w3 = raw["lin_w"].reshape(odim, odim, F)            # (O, C, F)
    w3 = jnp.transpose(w3, (2, 1, 0))                   # (F, C, O)
    w3 = jnp.pad(w3, ((0, 0), (0, pc), (0, pc)))        # (F, Cp, Cp)
    w3 = (w3 * xscale).reshape(F * Cp, Cp).astype(jnp.bfloat16)
    b3 = (jnp.pad(raw["lin_b"], (0, pc)) * xscale).reshape(1, Cp)

    pe = jnp.pad(positional_encoding_table(odim, max_len), ((0, 0), (0, pc)))

    return {
        "conv1_w": w1.astype(jnp.float32), "conv1_b": b1.astype(jnp.float32),
        "conv2_w": w2, "conv2_b": b2.astype(jnp.float32),
        "lin_w": w3, "lin_b": b3.astype(jnp.float32),
        "pe": pe.astype(jnp.float32),
    }


@functools.partial(jax.jit, static_argnames=("odim",))
def conv2d_subsampling_forward(params, x, x_mask, *, odim):
    """x: (B, T, idim) f32; x_mask: (B, 1, T) bool.
    Returns (y, mask_sub) matching the PyTorch Conv2dSubsampling.forward."""
    B, T, idim = x.shape
    Cp = params["conv1_w"].shape[1]

    # conv1 (Cin=1): build the small (M1, 9) tap matrix, then VPU kernel.
    Ho1 = (T - 3) // 2 + 1
    Wo1 = (idim - 3) // 2 + 1
    x4 = x[..., None]                                    # (B, T, idim, 1)
    patches1 = jnp.concatenate(_tap_slices_nhwc(x4, Ho1, Wo1), axis=-1)
    patches1 = patches1.reshape(B * Ho1 * Wo1, 9).astype(jnp.float32)
    h1 = conv1_pallas(patches1, params["conv1_w"], params["conv1_b"])
    h1 = h1.reshape(B, Ho1, Wo1, Cp)                     # NHWC bf16

    # conv2: 9 shifted NHWC slices -> fused 9-matmul kernel (bias + ReLU).
    Ho2 = (Ho1 - 3) // 2 + 1
    Wo2 = (Wo1 - 3) // 2 + 1
    M2 = B * Ho2 * Wo2
    taps2 = [t.reshape(M2, Cp) for t in _tap_slices_nhwc(h1, Ho2, Wo2)]
    h2 = conv2_pallas(taps2, params["conv2_w"], params["conv2_b"])
    h2 = h2.reshape(B, Ho2, Wo2 * Cp)                    # channels-last flatten

    # Linear(odim*f, odim) fused with PositionalEncoding:
    #   y = (h2 @ W + b) * sqrt(odim) + pe[:t]   (scale folded into W, b)
    pe_t = params["pe"][:Ho2]                            # (t, Cp)
    y = linear_pe_pallas(h2, params["lin_w"], params["lin_b"], pe_t)
    y = y[:, :, :odim]                                   # drop lane padding

    # mask subsampling: x_mask[:, :, :-2:2][:, :, :-2:2]  (pure slicing)
    mask_sub = x_mask[:, :, :-2:2][:, :, :-2:2]
    return y, mask_sub
    # TODO(synk): dropout inside PositionalEncoding is identity (eval mode).


# ---------------------------------------------------------------------------
# Pure-JAX float32 reference (mirrors the PyTorch module) for validation
# ---------------------------------------------------------------------------
def reference_forward(raw, x, x_mask, odim, max_len=5000):
    h = x[:, None, :, :]
    h = jax.lax.conv_general_dilated(
        h, raw["conv1_w"], (2, 2), "VALID",
        dimension_numbers=("NCHW", "OIHW", "NCHW"))
    h = jax.nn.relu(h + raw["conv1_b"][None, :, None, None])
    h = jax.lax.conv_general_dilated(
        h, raw["conv2_w"], (2, 2), "VALID",
        dimension_numbers=("NCHW", "OIHW", "NCHW"))
    h = jax.nn.relu(h + raw["conv2_b"][None, :, None, None])
    b, c, t, f = h.shape
    h = jnp.transpose(h, (0, 2, 1, 3)).reshape(b, t, c * f)
    y = h @ raw["lin_w"].T + raw["lin_b"]
    pe = positional_encoding_table(odim, max_len)
    y = y * math.sqrt(odim) + pe[None, :t, :]
    return y, x_mask[:, :, :-2:2][:, :, :-2:2]


if __name__ == "__main__":
    key = jax.random.PRNGKey(0)
    k_x, k_p = jax.random.split(key)

    B, T, idim, odim = 2, 16, 16, 32
    x = jax.random.normal(k_x, (B, T, idim), jnp.float32)
    x_mask = jnp.ones((B, 1, T), dtype=bool)

    raw = init_raw_params(idim, odim, k_p)
    params = prepare_params(raw, idim, odim)

    y, mask_sub = conv2d_subsampling_forward(params, x, x_mask, odim=odim)
    jax.block_until_ready(y)
    jax.block_until_ready(mask_sub)

    t_out = ((T - 1) // 2 - 1) // 2
    assert y.shape == (B, t_out, odim), y.shape
    assert mask_sub.shape == (B, 1, t_out), mask_sub.shape

    # Numerical sanity vs. pure-JAX f32 reference (bf16 matmuls -> loose tol).
    y_ref, mask_ref = reference_forward(raw, x, x_mask, odim)
    np.testing.assert_allclose(np.asarray(y), np.asarray(y_ref),
                               rtol=5e-2, atol=1e-1)
    assert bool(jnp.all(mask_sub == mask_ref))

    print("KERNEL_OK")
</pallas_src>

<mosaic_0001>
module attributes {stable_mosaic.version = 11 : i64} {
  func.func @_conv1_kernel(%arg0: i32, %arg1: memref<98x9xf32, #tpu.memory_space<vmem>>, %arg2: memref<9x128xf32, #tpu.memory_space<vmem>>, %arg3: memref<1x128xf32, #tpu.memory_space<vmem>>, %arg4: memref<98x128xbf16, #tpu.memory_space<vmem>>) attributes {dimension_semantics = [#tpu.dimension_semantics<parallel>], iteration_bounds = array<i64: 1>, scalar_prefetch = 0 : i64, scratch_operands = 0 : i64, tpu.core_type = #tpu.core_type<tc>, window_params = [{transform_indices = @transform_0, window_bounds = array<i64: 98, 9>}, {pipeline_mode = #tpu.pipeline_mode<synchronous>, transform_indices = @transform_1, window_bounds = array<i64: 9, 128>}, {pipeline_mode = #tpu.pipeline_mode<synchronous>, transform_indices = @transform_2, window_bounds = array<i64: 1, 128>}, {transform_indices = @transform_3, window_bounds = array<i64: 98, 128>}]} {
    %c0 = arith.constant 0 : index
    %c0_0 = arith.constant 0 : index
    %0 = vector.load %arg1[%c0, %c0_0] : memref<98x9xf32, #tpu.memory_space<vmem>>, vector<98x9xf32>
    %c0_1 = arith.constant 0 : index
    %c0_2 = arith.constant 0 : index
    %1 = vector.load %arg2[%c0_1, %c0_2] : memref<9x128xf32, #tpu.memory_space<vmem>>, vector<9x128xf32>
    %2 = vector.extract_strided_slice %0 {offsets = [0, 0], sizes = [98, 1], strides = [1, 1]} : vector<98x9xf32> to vector<98x1xf32>
    %3 = vector.extract_strided_slice %1 {offsets = [0, 0], sizes = [1, 128], strides = [1, 1]} : vector<9x128xf32> to vector<1x128xf32>
    %4 = vector.broadcast %2 : vector<98x1xf32> to vector<98x128xf32>
    %5 = vector.broadcast %3 : vector<1x128xf32> to vector<98x128xf32>
    %6 = arith.mulf %4, %5 : vector<98x128xf32>
    %7 = vector.extract_strided_slice %0 {offsets = [0, 1], sizes = [98, 1], strides = [1, 1]} : vector<98x9xf32> to vector<98x1xf32>
    %8 = vector.extract_strided_slice %1 {offsets = [1, 0], sizes = [1, 128], strides = [1, 1]} : vector<9x128xf32> to vector<1x128xf32>
    %9 = vector.broadcast %7 : vector<98x1xf32> to vector<98x128xf32>
    %10 = vector.broadcast %8 : vector<1x128xf32> to vector<98x128xf32>
    %11 = arith.mulf %9, %10 : vector<98x128xf32>
    %12 = arith.addf %6, %11 : vector<98x128xf32>
    %13 = vector.extract_strided_slice %0 {offsets = [0, 2], sizes = [98, 1], strides = [1, 1]} : vector<98x9xf32> to vector<98x1xf32>
    %14 = vector.extract_strided_slice %1 {offsets = [2, 0], sizes = [1, 128], strides = [1, 1]} : vector<9x128xf32> to vector<1x128xf32>
    %15 = vector.broadcast %13 : vector<98x1xf32> to vector<98x128xf32>
    %16 = vector.broadcast %14 : vector<1x128xf32> to vector<98x128xf32>
    %17 = arith.mulf %15, %16 : vector<98x128xf32>
    %18 = arith.addf %12, %17 : vector<98x128xf32>
    %19 = vector.extract_strided_slice %0 {offsets = [0, 3], sizes = [98, 1], strides = [1, 1]} : vector<98x9xf32> to vector<98x1xf32>
    %20 = vector.extract_strided_slice %1 {offsets = [3, 0], sizes = [1, 128], strides = [1, 1]} : vector<9x128xf32> to vector<1x128xf32>
    %21 = vector.broadcast %19 : vector<98x1xf32> to vector<98x128xf32>
    %22 = vector.broadcast %20 : vector<1x128xf32> to vector<98x128xf32>
    %23 = arith.mulf %21, %22 : vector<98x128xf32>
    %24 = arith.addf %18, %23 : vector<98x128xf32>
    %25 = vector.extract_strided_slice %0 {offsets = [0, 4], sizes = [98, 1], strides = [1, 1]} : vector<98x9xf32> to vector<98x1xf32>
    %26 = vector.extract_strided_slice %1 {offsets = [4, 0], sizes = [1, 128], strides = [1, 1]} : vector<9x128xf32> to vector<1x128xf32>
    %27 = vector.broadcast %25 : vector<98x1xf32> to vector<98x128xf32>
    %28 = vector.broadcast %26 : vector<1x128xf32> to vector<98x128xf32>
    %29 = arith.mulf %27, %28 : vector<98x128xf32>
    %30 = arith.addf %24, %29 : vector<98x128xf32>
    %31 = vector.extract_strided_slice %0 {offsets = [0, 5], sizes = [98, 1], strides = [1, 1]} : vector<98x9xf32> to vector<98x1xf32>
    %32 = vector.extract_strided_slice %1 {offsets = [5, 0], sizes = [1, 128], strides = [1, 1]} : vector<9x128xf32> to vector<1x128xf32>
    %33 = vector.broadcast %31 : vector<98x1xf32> to vector<98x128xf32>
    %34 = vector.broadcast %32 : vector<1x128xf32> to vector<98x128xf32>
    %35 = arith.mulf %33, %34 : vector<98x128xf32>
    %36 = arith.addf %30, %35 : vector<98x128xf32>
    %37 = vector.extract_strided_slice %0 {offsets = [0, 6], sizes = [98, 1], strides = [1, 1]} : vector<98x9xf32> to vector<98x1xf32>
    %38 = vector.extract_strided_slice %1 {offsets = [6, 0], sizes = [1, 128], strides = [1, 1]} : vector<9x128xf32> to vector<1x128xf32>
    %39 = vector.broadcast %37 : vector<98x1xf32> to vector<98x128xf32>
    %40 = vector.broadcast %38 : vector<1x128xf32> to vector<98x128xf32>
    %41 = arith.mulf %39, %40 : vector<98x128xf32>
    %42 = arith.addf %36, %41 : vector<98x128xf32>
    %43 = vector.extract_strided_slice %0 {offsets = [0, 7], sizes = [98, 1], strides = [1, 1]} : vector<98x9xf32> to vector<98x1xf32>
    %44 = vector.extract_strided_slice %1 {offsets = [7, 0], sizes = [1, 128], strides = [1, 1]} : vector<9x128xf32> to vector<1x128xf32>
    %45 = vector.broadcast %43 : vector<98x1xf32> to vector<98x128xf32>
    %46 = vector.broadcast %44 : vector<1x128xf32> to vector<98x128xf32>
    %47 = arith.mulf %45, %46 : vector<98x128xf32>
    %48 = arith.addf %42, %47 : vector<98x128xf32>
    %49 = vector.extract_strided_slice %0 {offsets = [0, 8], sizes = [98, 1], strides = [1, 1]} : vector<98x9xf32> to vector<98x1xf32>
    %50 = vector.extract_strided_slice %1 {offsets = [8, 0], sizes = [1, 128], strides = [1, 1]} : vector<9x128xf32> to vector<1x128xf32>
    %51 = vector.broadcast %49 : vector<98x1xf32> to vector<98x128xf32>
    %52 = vector.broadcast %50 : vector<1x128xf32> to vector<98x128xf32>
    %53 = arith.mulf %51, %52 : vector<98x128xf32>
    %54 = arith.addf %48, %53 : vector<98x128xf32>
    %c0_3 = arith.constant 0 : index
    %c0_4 = arith.constant 0 : index
    %55 = vector.load %arg3[%c0_3, %c0_4] : memref<1x128xf32, #tpu.memory_space<vmem>>, vector<1x128xf32>
    %56 = vector.broadcast %55 : vector<1x128xf32> to vector<98x128xf32>
    %57 = arith.addf %54, %56 : vector<98x128xf32>
    %cst = arith.constant 0.000000e+00 : f32
    %58 = vector.broadcast %cst : f32 to vector<98x128xf32>
    %59 = arith.maximumf %57, %58 : vector<98x128xf32>
    %60 = arith.truncf %59 : vector<98x128xf32> to vector<98x128xbf16>
    %c0_5 = arith.constant 0 : index
    %c0_6 = arith.constant 0 : index
    %61 = vector.load %arg4[%c0_5, %c0_6] : memref<98x128xbf16, #tpu.memory_space<vmem>>, vector<98x128xbf16>
    tpu.vector_store %arg4[%c0_5, %c0_6], %60 {strides = array<i32>} : memref<98x128xbf16, #tpu.memory_space<vmem>>, vector<98x128xbf16>,
    return
  }
  func.func @transform_0(%arg0: i32) -> (i32, i32) {
    %c0_i32 = arith.constant 0 : i32
    %c0_i32_0 = arith.constant 0 : i32
    return %arg0, %c0_i32 : i32, i32
  }
  func.func @transform_1(%arg0: i32) -> (i32, i32) {
    %c0_i32 = arith.constant 0 : i32
    %c0_i32_0 = arith.constant 0 : i32
    %c0_i32_1 = arith.constant 0 : i32
    return %c0_i32, %c0_i32_0 : i32, i32
  }
  func.func @transform_2(%arg0: i32) -> (i32, i32) {
    %c0_i32 = arith.constant 0 : i32
    %c0_i32_0 = arith.constant 0 : i32
    %c0_i32_1 = arith.constant 0 : i32
    return %c0_i32, %c0_i32_0 : i32, i32
  }
  func.func @transform_3(%arg0: i32) -> (i32, i32) {
    %c0_i32 = arith.constant 0 : i32
    %c0_i32_0 = arith.constant 0 : i32
    return %arg0, %c0_i32 : i32, i32
  }
}

module attributes {stable_mosaic.version = 11 : i64} {
  func.func @_conv2_kernel(%arg0: i32, %arg1: memref<18x128xbf16, #tpu.memory_space<vmem>>, %arg2: memref<18x128xbf16, #tpu.memory_space<vmem>>, %arg3: memref<18x128xbf16, #tpu.memory_space<vmem>>, %arg4: memref<18x128xbf16, #tpu.memory_space<vmem>>, %arg5: memref<18x128xbf16, #tpu.memory_space<vmem>>, %arg6: memref<18x128xbf16, #tpu.memory_space<vmem>>, %arg7: memref<18x128xbf16, #tpu.memory_space<vmem>>, %arg8: memref<18x128xbf16, #tpu.memory_space<vmem>>, %arg9: memref<18x128xbf16, #tpu.memory_space<vmem>>, %arg10: memref<9x128x128xbf16, #tpu.memory_space<vmem>>, %arg11: memref<1x128xf32, #tpu.memory_space<vmem>>, %arg12: memref<18x128xbf16, #tpu.memory_space<vmem>>) attributes {dimension_semantics = [#tpu.dimension_semantics<parallel>], iteration_bounds = array<i64: 1>, scalar_prefetch = 0 : i64, scratch_operands = 0 : i64, tpu.core_type = #tpu.core_type<tc>, window_params = [{transform_indices = @transform_0, window_bounds = array<i64: 18, 128>}, {transform_indices = @transform_1, window_bounds = array<i64: 18, 128>}, {transform_indices = @transform_2, window_bounds = array<i64: 18, 128>}, {transform_indices = @transform_3, window_bounds = array<i64: 18, 128>}, {transform_indices = @transform_4, window_bounds = array<i64: 18, 128>}, {transform_indices = @transform_5, window_bounds = array<i64: 18, 128>}, {transform_indices = @transform_6, window_bounds = array<i64: 18, 128>}, {transform_indices = @transform_7, window_bounds = array<i64: 18, 128>}, {transform_indices = @transform_8, window_bounds = array<i64: 18, 128>}, {pipeline_mode = #tpu.pipeline_mode<synchronous>, transform_indices = @transform_9, window_bounds = array<i64: 9, 128, 128>}, {pipeline_mode = #tpu.pipeline_mode<synchronous>, transform_indices = @transform_10, window_bounds = array<i64: 1, 128>}, {transform_indices = @transform_11, window_bounds = array<i64: 18, 128>}]} {
    %c0 = arith.constant 0 : index
    %c0_0 = arith.constant 0 : index
    %0 = vector.load %arg1[%c0, %c0_0] : memref<18x128xbf16, #tpu.memory_space<vmem>>, vector<18x128xbf16>
    %c0_1 = arith.constant 0 : index
    %c0_2 = arith.constant 0 : index
    %c0_3 = arith.constant 0 : index
    %1 = vector.load %arg10[%c0_1, %c0_2, %c0_3] : memref<9x128x128xbf16, #tpu.memory_space<vmem>>, vector<1x128x128xbf16>
    %2 = vector.shape_cast %1 : vector<1x128x128xbf16> to vector<128x128xbf16>
    %cst = arith.constant dense<0.000000e+00> : vector<18x128xf32>
    %3 = tpu.matmul %0, %2, %cst {dimension_numbers = #tpu.dot_dimension_numbers<[1], [0], [0], [1], [0, 0, 1, 1], [], []>} : vector<18x128xbf16>, vector<128x128xbf16>, vector<18x128xf32> -> vector<18x128xf32>
    %c0_4 = arith.constant 0 : index
    %c0_5 = arith.constant 0 : index
    %4 = vector.load %arg2[%c0_4, %c0_5] : memref<18x128xbf16, #tpu.memory_space<vmem>>, vector<18x128xbf16>
    %c1 = arith.constant 1 : index
    %c0_6 = arith.constant 0 : index
    %c0_7 = arith.constant 0 : index
    %5 = vector.load %arg10[%c1, %c0_6, %c0_7] : memref<9x128x128xbf16, #tpu.memory_space<vmem>>, vector<1x128x128xbf16>
    %6 = vector.shape_cast %5 : vector<1x128x128xbf16> to vector<128x128xbf16>
    %cst_8 = arith.constant dense<0.000000e+00> : vector<18x128xf32>
    %7 = tpu.matmul %4, %6, %cst_8 {dimension_numbers = #tpu.dot_dimension_numbers<[1], [0], [0], [1], [0, 0, 1, 1], [], []>} : vector<18x128xbf16>, vector<128x128xbf16>, vector<18x128xf32> -> vector<18x128xf32>
    %8 = arith.addf %3, %7 : vector<18x128xf32>
    %c0_9 = arith.constant 0 : index
    %c0_10 = arith.constant 0 : index
    %9 = vector.load %arg3[%c0_9, %c0_10] : memref<18x128xbf16, #tpu.memory_space<vmem>>, vector<18x128xbf16>
    %c2 = arith.constant 2 : index
    %c0_11 = arith.constant 0 : index
    %c0_12 = arith.constant 0 : index
    %10 = vector.load %arg10[%c2, %c0_11, %c0_12] : memref<9x128x128xbf16, #tpu.memory_space<vmem>>, vector<1x128x128xbf16>
    %11 = vector.shape_cast %10 : vector<1x128x128xbf16> to vector<128x128xbf16>
    %cst_13 = arith.constant dense<0.000000e+00> : vector<18x128xf32>
    %12 = tpu.matmul %9, %11, %cst_13 {dimension_numbers = #tpu.dot_dimension_numbers<[1], [0], [0], [1], [0, 0, 1, 1], [], []>} : vector<18x128xbf16>, vector<128x128xbf16>, vector<18x128xf32> -> vector<18x128xf32>
    %13 = arith.addf %8, %12 : vector<18x128xf32>
    %c0_14 = arith.constant 0 : index
    %c0_15 = arith.constant 0 : index
    %14 = vector.load %arg4[%c0_14, %c0_15] : memref<18x128xbf16, #tpu.memory_space<vmem>>, vector<18x128xbf16>
    %c3 = arith.constant 3 : index
    %c0_16 = arith.constant 0 : index
    %c0_17 = arith.constant 0 : index
    %15 = vector.load %arg10[%c3, %c0_16, %c0_17] : memref<9x128x128xbf16, #tpu.memory_space<vmem>>, vector<1x128x128xbf16>
    %16 = vector.shape_cast %15 : vector<1x128x128xbf16> to vector<128x128xbf16>
    %cst_18 = arith.constant dense<0.000000e+00> : vector<18x128xf32>
    %17 = tpu.matmul %14, %16, %cst_18 {dimension_numbers = #tpu.dot_dimension_numbers<[1], [0], [0], [1], [0, 0, 1, 1], [], []>} : vector<18x128xbf16>, vector<128x128xbf16>, vector<18x128xf32> -> vector<18x128xf32>
    %18 = arith.addf %13, %17 : vector<18x128xf32>
    %c0_19 = arith.constant 0 : index
    %c0_20 = arith.constant 0 : index
    %19 = vector.load %arg5[%c0_19, %c0_20] : memref<18x128xbf16, #tpu.memory_space<vmem>>, vector<18x128xbf16>
    %c4 = arith.constant 4 : index
    %c0_21 = arith.constant 0 : index
    %c0_22 = arith.constant 0 : index
    %20 = vector.load %arg10[%c4, %c0_21, %c0_22] : memref<9x128x128xbf16, #tpu.memory_space<vmem>>, vector<1x128x128xbf16>
    %21 = vector.shape_cast %20 : vector<1x128x128xbf16> to vector<128x128xbf16>
    %cst_23 = arith.constant dense<0.000000e+00> : vector<18x128xf32>
    %22 = tpu.matmul %19, %21, %cst_23 {dimension_numbers = #tpu.dot_dimension_numbers<[1], [0], [0], [1], [0, 0, 1, 1], [], []>} : vector<18x128xbf16>, vector<128x128xbf16>, vector<18x128xf32> -> vector<18x128xf32>
    %23 = arith.addf %18, %22 : vector<18x128xf32>
    %c0_24 = arith.constant 0 : index
    %c0_25 = arith.constant 0 : index
    %24 = vector.load %arg6[%c0_24, %c0_25] : memref<18x128xbf16, #tpu.memory_space<vmem>>, vector<18x128xbf16>
    %c5 = arith.constant 5 : index
    %c0_26 = arith.constant 0 : index
    %c0_27 = arith.constant 0 : index
    %25 = vector.load %arg10[%c5, %c0_26, %c0_27] : memref<9x128x128xbf16, #tpu.memory_space<vmem>>, vector<1x128x128xbf16>
    %26 = vector.shape_cast %25 : vector<1x128x128xbf16> to vector<128x128xbf16>
    %cst_28 = arith.constant dense<0.000000e+00> : vector<18x128xf32>
    %27 = tpu.matmul %24, %26, %cst_28 {dimension_numbers = #tpu.dot_dimension_numbers<[1], [0], [0], [1], [0, 0, 1, 1], [], []>} : vector<18x128xbf16>, vector<128x128xbf16>, vector<18x128xf32> -> vector<18x128xf32>
    %28 = arith.addf %23, %27 : vector<18x128xf32>
    %c0_29 = arith.constant 0 : index
    %c0_30 = arith.constant 0 : index
    %29 = vector.load %arg7[%c0_29, %c0_30] : memref<18x128xbf16, #tpu.memory_space<vmem>>, vector<18x128xbf16>
    %c6 = arith.constant 6 : index
    %c0_31 = arith.constant 0 : index
    %c0_32 = arith.constant 0 : index
    %30 = vector.load %arg10[%c6, %c0_31, %c0_32] : memref<9x128x128xbf16, #tpu.memory_space<vmem>>, vector<1x128x128xbf16>
    %31 = vector.shape_cast %30 : vector<1x128x128xbf16> to vector<128x128xbf16>
    %cst_33 = arith.constant dense<0.000000e+00> : vector<18x128xf32>
    %32 = tpu.matmul %29, %31, %cst_33 {dimension_numbers = #tpu.dot_dimension_numbers<[1], [0], [0], [1], [0, 0, 1, 1], [], []>} : vector<18x128xbf16>, vector<128x128xbf16>, vector<18x128xf32> -> vector<18x128xf32>
    %33 = arith.addf %28, %32 : vector<18x128xf32>
    %c0_34 = arith.constant 0 : index
    %c0_35 = arith.constant 0 : index
    %34 = vector.load %arg8[%c0_34, %c0_35] : memref<18x128xbf16, #tpu.memory_space<vmem>>, vector<18x128xbf16>
    %c7 = arith.constant 7 : index
    %c0_36 = arith.constant 0 : index
    %c0_37 = arith.constant 0 : index
    %35 = vector.load %arg10[%c7, %c0_36, %c0_37] : memref<9x128x128xbf16, #tpu.memory_space<vmem>>, vector<1x128x128xbf16>
    %36 = vector.shape_cast %35 : vector<1x128x128xbf16> to vector<128x128xbf16>
    %cst_38 = arith.constant dense<0.000000e+00> : vector<18x128xf32>
    %37 = tpu.matmul %34, %36, %cst_38 {dimension_numbers = #tpu.dot_dimension_numbers<[1], [0], [0], [1], [0, 0, 1, 1], [], []>} : vector<18x128xbf16>, vector<128x128xbf16>, vector<18x128xf32> -> vector<18x128xf32>
    %38 = arith.addf %33, %37 : vector<18x128xf32>
    %c0_39 = arith.constant 0 : index
    %c0_40 = arith.constant 0 : index
    %39 = vector.load %arg9[%c0_39, %c0_40] : memref<18x128xbf16, #tpu.memory_space<vmem>>, vector<18x128xbf16>
    %c8 = arith.constant 8 : index
    %c0_41 = arith.constant 0 : index
    %c0_42 = arith.constant 0 : index
    %40 = vector.load %arg10[%c8, %c0_41, %c0_42] : memref<9x128x128xbf16, #tpu.memory_space<vmem>>, vector<1x128x128xbf16>
    %41 = vector.shape_cast %40 : vector<1x128x128xbf16> to vector<128x128xbf16>
    %cst_43 = arith.constant dense<0.000000e+00> : vector<18x128xf32>
    %42 = tpu.matmul %39, %41, %cst_43 {dimension_numbers = #tpu.dot_dimension_numbers<[1], [0], [0], [1], [0, 0, 1, 1], [], []>} : vector<18x128xbf16>, vector<128x128xbf16>, vector<18x128xf32> -> vector<18x128xf32>
    %43 = arith.addf %38, %42 : vector<18x128xf32>
    %c0_44 = arith.constant 0 : index
    %c0_45 = arith.constant 0 : index
    %44 = vector.load %arg11[%c0_44, %c0_45] : memref<1x128xf32, #tpu.memory_space<vmem>>, vector<1x128xf32>
    %45 = vector.broadcast %44 : vector<1x128xf32> to vector<18x128xf32>
    %46 = arith.addf %43, %45 : vector<18x128xf32>
    %cst_46 = arith.constant 0.000000e+00 : f32
    %47 = vector.broadcast %cst_46 : f32 to vector<18x128xf32>
    %48 = arith.maximumf %46, %47 : vector<18x128xf32>
    %49 = arith.truncf %48 : vector<18x128xf32> to vector<18x128xbf16>
    %c0_47 = arith.constant 0 : index
    %c0_48 = arith.constant 0 : index
    %50 = vector.load %arg12[%c0_47, %c0_48] : memref<18x128xbf16, #tpu.memory_space<vmem>>, vector<18x128xbf16>
    tpu.vector_store %arg12[%c0_47, %c0_48], %49 {strides = array<i32>} : memref<18x128xbf16, #tpu.memory_space<vmem>>, vector<18x128xbf16>,
    return
  }
  func.func @transform_0(%arg0: i32) -> (i32, i32) {
    %c0_i32 = arith.constant 0 : i32
    %c0_i32_0 = arith.constant 0 : i32
    return %arg0, %c0_i32 : i32, i32
  }
  func.func @transform_1(%arg0: i32) -> (i32, i32) {
    %c0_i32 = arith.constant 0 : i32
    %c0_i32_0 = arith.constant 0 : i32
    return %arg0, %c0_i32 : i32, i32
  }
  func.func @transform_2(%arg0: i32) -> (i32, i32) {
    %c0_i32 = arith.constant 0 : i32
    %c0_i32_0 = arith.constant 0 : i32
    return %arg0, %c0_i32 : i32, i32
  }
  func.func @transform_3(%arg0: i32) -> (i32, i32) {
    %c0_i32 = arith.constant 0 : i32
    %c0_i32_0 = arith.constant 0 : i32
    return %arg0, %c0_i32 : i32, i32
  }
  func.func @transform_4(%arg0: i32) -> (i32, i32) {
    %c0_i32 = arith.constant 0 : i32
    %c0_i32_0 = arith.constant 0 : i32
    return %arg0, %c0_i32 : i32, i32
  }
  func.func @transform_5(%arg0: i32) -> (i32, i32) {
    %c0_i32 = arith.constant 0 : i32
    %c0_i32_0 = arith.constant 0 : i32
    return %arg0, %c0_i32 : i32, i32
  }
  func.func @transform_6(%arg0: i32) -> (i32, i32) {
    %c0_i32 = arith.constant 0 : i32
    %c0_i32_0 = arith.constant 0 : i32
    return %arg0, %c0_i32 : i32, i32
  }
  func.func @transform_7(%arg0: i32) -> (i32, i32) {
    %c0_i32 = arith.constant 0 : i32
    %c0_i32_0 = arith.constant 0 : i32
    return %arg0, %c0_i32 : i32, i32
  }
  func.func @transform_8(%arg0: i32) -> (i32, i32) {
    %c0_i32 = arith.constant 0 : i32
    %c0_i32_0 = arith.constant 0 : i32
    return %arg0, %c0_i32 : i32, i32
  }
  func.func @transform_9(%arg0: i32) -> (i32, i32, i32) {
    %c0_i32 = arith.constant 0 : i32
    %c0_i32_0 = arith.constant 0 : i32
    %c0_i32_1 = arith.constant 0 : i32
    %c0_i32_2 = arith.constant 0 : i32
    return %c0_i32, %c0_i32_0, %c0_i32_1 : i32, i32, i32
  }
  func.func @transform_10(%arg0: i32) -> (i32, i32) {
    %c0_i32 = arith.constant 0 : i32
    %c0_i32_0 = arith.constant 0 : i32
    %c0_i32_1 = arith.constant 0 : i32
    return %c0_i32, %c0_i32_0 : i32, i32
  }
  func.func @transform_11(%arg0: i32) -> (i32, i32) {
    %c0_i32 = arith.constant 0 : i32
    %c0_i32_0 = arith.constant 0 : i32
    return %arg0, %c0_i32 : i32, i32
  }
}

module attributes {stable_mosaic.version = 11 : i64} {
  func.func @_linear_pe_kernel(%arg0: i32, %arg1: i32, %arg2: memref<1x3x384xbf16, #tpu.memory_space<vmem>>, %arg3: memref<384x128xbf16, #tpu.memory_space<vmem>>, %arg4: memref<1x128xf32, #tpu.memory_space<vmem>>, %arg5: memref<3x128xf32, #tpu.memory_space<vmem>>, %arg6: memref<1x3x128xf32, #tpu.memory_space<vmem>>) attributes {dimension_semantics = [#tpu.dimension_semantics<parallel>, #tpu.dimension_semantics<parallel>], iteration_bounds = array<i64: 2, 1>, scalar_prefetch = 0 : i64, scratch_operands = 0 : i64, tpu.core_type = #tpu.core_type<tc>, window_params = [{transform_indices = @transform_0, window_bounds = array<i64: 1, 3, 384>}, {pipeline_mode = #tpu.pipeline_mode<synchronous>, transform_indices = @transform_1, window_bounds = array<i64: 384, 128>}, {pipeline_mode = #tpu.pipeline_mode<synchronous>, transform_indices = @transform_2, window_bounds = array<i64: 1, 128>}, {transform_indices = @transform_3, window_bounds = array<i64: 3, 128>}, {transform_indices = @transform_4, window_bounds = array<i64: 1, 3, 128>}]} {
    %c0 = arith.constant 0 : index
    %c0_0 = arith.constant 0 : index
    %c0_1 = arith.constant 0 : index
    %0 = vector.load %arg2[%c0, %c0_0, %c0_1] : memref<1x3x384xbf16, #tpu.memory_space<vmem>>, vector<1x3x384xbf16>
    %1 = vector.shape_cast %0 : vector<1x3x384xbf16> to vector<3x384xbf16>
    %c0_2 = arith.constant 0 : index
    %c0_3 = arith.constant 0 : index
    %2 = vector.load %arg3[%c0_2, %c0_3] : memref<384x128xbf16, #tpu.memory_space<vmem>>, vector<384x128xbf16>
    %cst = arith.constant dense<0.000000e+00> : vector<3x128xf32>
    %3 = tpu.matmul %1, %2, %cst {dimension_numbers = #tpu.dot_dimension_numbers<[1], [0], [0], [1], [0, 0, 1, 1], [], []>} : vector<3x384xbf16>, vector<384x128xbf16>, vector<3x128xf32> -> vector<3x128xf32>
    %c0_4 = arith.constant 0 : index
    %c0_5 = arith.constant 0 : index
    %4 = vector.load %arg4[%c0_4, %c0_5] : memref<1x128xf32, #tpu.memory_space<vmem>>, vector<1x128xf32>
    %5 = vector.broadcast %4 : vector<1x128xf32> to vector<3x128xf32>
    %6 = arith.addf %3, %5 : vector<3x128xf32>
    %c0_6 = arith.constant 0 : index
    %c0_7 = arith.constant 0 : index
    %7 = vector.load %arg5[%c0_6, %c0_7] : memref<3x128xf32, #tpu.memory_space<vmem>>, vector<3x128xf32>
    %8 = arith.addf %6, %7 : vector<3x128xf32>
    %c0_8 = arith.constant 0 : index
    %c0_9 = arith.constant 0 : index
    %c0_10 = arith.constant 0 : index
    %9 = vector.load %arg6[%c0_8, %c0_9, %c0_10] : memref<1x3x128xf32, #tpu.memory_space<vmem>>, vector<1x3x128xf32>
    %10 = vector.shape_cast %9 : vector<1x3x128xf32> to vector<3x128xf32>
    %11 = vector.shape_cast %8 : vector<3x128xf32> to vector<1x3x128xf32>
    tpu.vector_store %arg6[%c0_8, %c0_9, %c0_10], %11 {strides = array<i32>} : memref<1x3x128xf32, #tpu.memory_space<vmem>>, vector<1x3x128xf32>,
    return
  }
  func.func @transform_0(%arg0: i32, %arg1: i32) -> (i32, i32, i32) {
    %c0_i32 = arith.constant 0 : i32
    %c0_i32_0 = arith.constant 0 : i32
    return %arg0, %arg1, %c0_i32 : i32, i32, i32
  }
  func.func @transform_1(%arg0: i32, %arg1: i32) -> (i32, i32) {
    %c0_i32 = arith.constant 0 : i32
    %c0_i32_0 = arith.constant 0 : i32
    %c0_i32_1 = arith.constant 0 : i32
    return %c0_i32, %c0_i32_0 : i32, i32
  }
  func.func @transform_2(%arg0: i32, %arg1: i32) -> (i32, i32) {
    %c0_i32 = arith.constant 0 : i32
    %c0_i32_0 = arith.constant 0 : i32
    %c0_i32_1 = arith.constant 0 : i32
    return %c0_i32, %c0_i32_0 : i32, i32
  }
  func.func @transform_3(%arg0: i32, %arg1: i32) -> (i32, i32) {
    %c0_i32 = arith.constant 0 : i32
    %c0_i32_0 = arith.constant 0 : i32
    return %arg1, %c0_i32 : i32, i32
  }
  func.func @transform_4(%arg0: i32, %arg1: i32) -> (i32, i32, i32) {
    %c0_i32 = arith.constant 0 : i32
    %c0_i32_0 = arith.constant 0 : i32
    return %arg0, %arg1, %c0_i32 : i32, i32, i32
  }
}

</mosaic_0001>

<llo_original>
// kernel: conv2d_subsampling_forward.3
$region0: #{conv2d_subsampling_forward.3}
  #allocation0 [shape = 'u32[]', space=smem, size = 0x4, offset = 0x4, fixed_abs, tag = 'smem constant byte address 0x4 - core index']
  #allocation1 [shape = 'u32[72,128]{1,0:T(1,128)}', space=vmem, size = 0x9000, scoped, tag = 'internal scratch']
  %s0 = inlined_call_operand.vmem [shape: f32[98,9], index: 0, kind: input, shape index: {}]
  %s1 = inlined_call_operand.hbm [shape: f32[9,128], index: 1, kind: input, shape index: {}]
  %s2 = inlined_call_operand.hbm [shape: f32[1,128], index: 2, kind: input, shape index: {}]
  %s3 = inlined_call_operand.vmem [shape: bf16[98,128], index: 3, kind: output, shape index: {}]
  %s4 = sld [smem:[#allocation0]]
  $region30: #{conv2d_subsampling_forward.3} parent=0
    _
  %s6 = ssub.s32 1, %s4
  %s7 = scalar_select 0, %s6, %s4
  $region1: #{conv2d_subsampling_forward.3} parent=0
    #allocation2 [shape = 'u8[8192]{0}', space=vmem, size = 0x2000, scoped, tag = 'input window, operand 1, single buffered']
    #allocation3 [shape = 's32[1]{0}', space=sflag, size = 0x4, scoped, tag = 'scoped memory for conv2d_subsampling_forward.3']
    #allocation4 [shape = 'u8[512]{0}', space=vmem, size = 0x400, scoped, tag = 'input window, operand 2, single buffered']
    #allocation5 [shape = 's32[1]{0}', space=sflag, size = 0x4, scoped, tag = 'scoped memory for conv2d_subsampling_forward.3']
    %8 = vsyncpa [#allocation3], 0
    %9 = vsyncpa [#allocation5], 0
    // Predicated region
    $region2: #{conv2d_subsampling_forward.3} parent=1 // pred_check
      _
    $region3: #{conv2d_subsampling_forward.3} parent=1 // pred_check_branch
      %11 = sbr.rel (0) target = $region5
    $region4: #{conv2d_subsampling_forward.3} parent=1 // pred_region
      _
    $region5: #{conv2d_subsampling_forward.3} parent=1 // pred_fallthru
      _
    // Predicated region
    $region6: #{conv2d_subsampling_forward.3} parent=1 // pred_check
      _
    $region7: #{conv2d_subsampling_forward.3} parent=1 // pred_check_branch
      %13 = sbr.rel (0) target = $region9
    $region8: #{conv2d_subsampling_forward.3} parent=1 // pred_region
      %15 = vsyncadd [#allocation3], 0
      %s16 = sshll.u32 %s1, 4
      %s17 = int_to_ptr.hbm [resolvable:$true] %s16
      %s18 = sshll.u32 [#allocation2], 4
      %s19 = int_to_ptr.vmem [resolvable:$true] %s18
      %24 = dma.hbm_to_vmem [thread:$0]  %s17, 256, %s19, [#allocation3], 128, 128, 8
    $region9: #{conv2d_subsampling_forward.3} parent=1 // pred_fallthru
      _
    // Predicated region
    $region10: #{conv2d_subsampling_forward.3} parent=1 // pred_check
      _
    $region11: #{conv2d_subsampling_forward.3} parent=1 // pred_check_branch
      %26 = sbr.rel (0) target = $region13
    $region12: #{conv2d_subsampling_forward.3} parent=1 // pred_region
      %28 = vsyncadd [#allocation5], 0
      %s30 = sshll.u32 %s2, 4
      %s31 = int_to_ptr.hbm [resolvable:$true] %s30
      %s32 = sshll.u32 [#allocation4], 4
      %s33 = int_to_ptr.vmem [resolvable:$true] %s32
      %35 = dma.hbm_to_vmem [thread:$0]  %s31, 16, %s33, [#allocation5]
    $region13: #{conv2d_subsampling_forward.3} parent=1 // pred_fallthru
      _
    // Predicated region
    $region14: #{conv2d_subsampling_forward.3} parent=1 // pred_check
      _
    $region15: #{conv2d_subsampling_forward.3} parent=1 // pred_check_branch
      %37 = sbr.rel (0) target = $region17
    $region16: #{conv2d_subsampling_forward.3} parent=1 // pred_region
      %39 = dma.done [#allocation3], 256
    $region17: #{conv2d_subsampling_forward.3} parent=1 // pred_fallthru
      _
    // Predicated region
    $region18: #{conv2d_subsampling_forward.3} parent=1 // pred_check
      _
    $region19: #{conv2d_subsampling_forward.3} parent=1 // pred_check_branch
      %41 = sbr.rel (0) target = $region21
    $region20: #{conv2d_subsampling_forward.3} parent=1 // pred_region
      %43 = dma.done [#allocation5], 16
    $region21: #{conv2d_subsampling_forward.3} parent=1 // pred_fallthru
      _
    %v44 = vld [vmem:[%s0] sm:$0xff]
    %v45 = vld [vmem:[%s0 + $0x8] sm:$0xff]
    %v46 = vld [vmem:[%s0 + $0x10] sm:$0xff]
    %v47 = vld [vmem:[%s0 + $0x18] sm:$0xff]
    %v48 = vld [vmem:[%s0 + $0x20] sm:$0xff]
    %v49 = vld [vmem:[%s0 + $0x28] sm:$0xff]
    %v50 = vld [vmem:[%s0 + $0x30] sm:$0xff]
    %v51 = vld [vmem:[%s0 + $0x38] sm:$0xff]
    %v52 = vld [vmem:[%s0 + $0x40] sm:$0xff]
    %v53 = vld [vmem:[%s0 + $0x48] sm:$0xff]
    %v54 = vld [vmem:[%s0 + $0x50] sm:$0xff]
    %v55 = vld [vmem:[%s0 + $0x58] sm:$0xff]
    %v56 = vld [vmem:[%s0 + $0x60] sm:$0x3]
    %v57 = vld [vmem:[#allocation2] sm:$0xff]
    %v58 = vld [vmem:[#allocation2 + $0x8] sm:$0x1]
    %60 = vset.pattern.permute.xlu0 0
    %61 = vperm.xlu0 %60, %v44
    %v62 = vpop.permute.xlu0 %61
    %65 = vset.pattern.permute.xlu0 0
    %66 = vperm.xlu0 %65, %v45
    %v67 = vpop.permute.xlu0 %66
    %70 = vset.pattern.permute.xlu0 0
    %71 = vperm.xlu0 %70, %v46
    %v72 = vpop.permute.xlu0 %71
    %75 = vset.pattern.permute.xlu0 0
    %76 = vperm.xlu0 %75, %v47
    %v77 = vpop.permute.xlu0 %76
    %80 = vset.pattern.permute.xlu0 0
    %81 = vperm.xlu0 %80, %v48
    %v82 = vpop.permute.xlu0 %81
    %85 = vset.pattern.permute.xlu0 0
    %86 = vperm.xlu0 %85, %v49
    %v87 = vpop.permute.xlu0 %86
    %90 = vset.pattern.permute.xlu0 0
    %91 = vperm.xlu0 %90, %v50
    %v92 = vpop.permute.xlu0 %91
    %95 = vset.pattern.permute.xlu0 0
    %96 = vperm.xlu0 %95, %v51
    %v97 = vpop.permute.xlu0 %96
    %100 = vset.pattern.permute.xlu0 0
    %101 = vperm.xlu0 %100, %v52
    %v102 = vpop.permute.xlu0 %101
    %105 = vset.pattern.permute.xlu0 0
    %106 = vperm.xlu0 %105, %v53
    %v107 = vpop.permute.xlu0 %106
    %110 = vset.pattern.permute.xlu0 0
    %111 = vperm.xlu0 %110, %v54
    %v112 = vpop.permute.xlu0 %111
    %115 = vset.pattern.permute.xlu0 0
    %116 = vperm.xlu0 %115, %v55
    %v117 = vpop.permute.xlu0 %116
    %120 = vset.pattern.permute.xlu0 0
    %121 = vperm.xlu0 %120, %v56
    %v122 = vpop.permute.xlu0 %121
    %v124 = vperm.slane %v57, 0
    %v125 = vmul.f32 %v62, %v124
    %v126 = vmul.f32 %v67, %v124
    %v127 = vmul.f32 %v72, %v124
    %v128 = vmul.f32 %v77, %v124
    %v129 = vmul.f32 %v82, %v124
    %v130 = vmul.f32 %v87, %v124
    %v131 = vmul.f32 %v92, %v124
    %v132 = vmul.f32 %v97, %v124
    %v133 = vmul.f32 %v102, %v124
    %v134 = vmul.f32 %v107, %v124
    %v135 = vmul.f32 %v112, %v124
    %v136 = vmul.f32 %v117, %v124
    %v137 = vmul.f32 %v122, %v124
    %138 = vset.pattern.permute.xlu0 1
    %139 = vperm.xlu0 %138, %v44
    %v140 = vpop.permute.xlu0 %139
    %142 = vset.pattern.permute.xlu0 1
    %143 = vperm.xlu0 %142, %v45
    %v144 = vpop.permute.xlu0 %143
    %146 = vset.pattern.permute.xlu0 1
    %147 = vperm.xlu0 %146, %v46
    %v148 = vpop.permute.xlu0 %147
    %150 = vset.pattern.permute.xlu0 1
    %151 = vperm.xlu0 %150, %v47
    %v152 = vpop.permute.xlu0 %151
    %154 = vset.pattern.permute.xlu0 1
    %155 = vperm.xlu0 %154, %v48
    %v156 = vpop.permute.xlu0 %155
    %158 = vset.pattern.permute.xlu0 1
    %159 = vperm.xlu0 %158, %v49
    %v160 = vpop.permute.xlu0 %159
    %162 = vset.pattern.permute.xlu0 1
    %163 = vperm.xlu0 %162, %v50
    %v164 = vpop.permute.xlu0 %163
    %166 = vset.pattern.permute.xlu0 1
    %167 = vperm.xlu0 %166, %v51
    %v168 = vpop.permute.xlu0 %167
    %170 = vset.pattern.permute.xlu0 1
    %171 = vperm.xlu0 %170, %v52
    %v172 = vpop.permute.xlu0 %171
    %174 = vset.pattern.permute.xlu0 1
    %175 = vperm.xlu0 %174, %v53
    %v176 = vpop.permute.xlu0 %175
    %178 = vset.pattern.permute.xlu0 1
    %179 = vperm.xlu0 %178, %v54
    %v180 = vpop.permute.xlu0 %179
    %182 = vset.pattern.permute.xlu0 1
    %183 = vperm.xlu0 %182, %v55
    %v184 = vpop.permute.xlu0 %183
    %186 = vset.pattern.permute.xlu0 1
    %187 = vperm.xlu0 %186, %v56
    %v188 = vpop.permute.xlu0 %187
    %v190 = vperm.slane %v57, 1
    %v191 = vmul.f32 %v140, %v190
    %v192 = vmul.f32 %v144, %v190
    %v193 = vmul.f32 %v148, %v190
    %v194 = vmul.f32 %v152, %v190
    %v195 = vmul.f32 %v156, %v190
    %v196 = vmul.f32 %v160, %v190
    %v197 = vmul.f32 %v164, %v190
    %v198 = vmul.f32 %v168, %v190
    %v199 = vmul.f32 %v172, %v190
    %v200 = vmul.f32 %v176, %v190
    %v201 = vmul.f32 %v180, %v190
    %v202 = vmul.f32 %v184, %v190
    %v203 = vmul.f32 %v188, %v190
    %v204 = vadd.f32 %v125, %v191
    %v205 = vadd.f32 %v126, %v192
    %v206 = vadd.f32 %v127, %v193
    %v207 = vadd.f32 %v128, %v194
    %v208 = vadd.f32 %v129, %v195
    %v209 = vadd.f32 %v130, %v196
    %v210 = vadd.f32 %v131, %v197
    %v211 = vadd.f32 %v132, %v198
    %v212 = vadd.f32 %v133, %v199
    %v213 = vadd.f32 %v134, %v200
    %v214 = vadd.f32 %v135, %v201
    %v215 = vadd.f32 %v136, %v202
    %v216 = vadd.f32 %v137, %v203
    %217 = vset.pattern.permute.xlu0 2
    %218 = vperm.xlu0 %217, %v44
    %v219 = vpop.permute.xlu0 %218
    %221 = vset.pattern.permute.xlu0 2
    %222 = vperm.xlu0 %221, %v45
    %v223 = vpop.permute.xlu0 %222
    %225 = vset.pattern.permute.xlu0 2
    %226 = vperm.xlu0 %225, %v46
    %v227 = vpop.permute.xlu0 %226
    %229 = vset.pattern.permute.xlu0 2
    %230 = vperm.xlu0 %229, %v47
    %v231 = vpop.permute.xlu0 %230
    %233 = vset.pattern.permute.xlu0 2
    %234 = vperm.xlu0 %233, %v48
    %v235 = vpop.permute.xlu0 %234
    %237 = vset.pattern.permute.xlu0 2
    %238 = vperm.xlu0 %237, %v49
    %v239 = vpop.permute.xlu0 %238
    %241 = vset.pattern.permute.xlu0 2
    %242 = vperm.xlu0 %241, %v50
    %v243 = vpop.permute.xlu0 %242
    %245 = vset.pattern.permute.xlu0 2
    %246 = vperm.xlu0 %245, %v51
    %v247 = vpop.permute.xlu0 %246
    %249 = vset.pattern.permute.xlu0 2
    %250 = vperm.xlu0 %249, %v52
    %v251 = vpop.permute.xlu0 %250
    %253 = vset.pattern.permute.xlu0 2
    %254 = vperm.xlu0 %253, %v53
    %v255 = vpop.permute.xlu0 %254
    %257 = vset.pattern.permute.xlu0 2
    %258 = vperm.xlu0 %257, %v54
    %v259 = vpop.permute.xlu0 %258
    %261 = vset.pattern.permute.xlu0 2
    %262 = vperm.xlu0 %261, %v55
    %v263 = vpop.permute.xlu0 %262
    %265 = vset.pattern.permute.xlu0 2
    %266 = vperm.xlu0 %265, %v56
    %v267 = vpop.permute.xlu0 %266
    %v269 = vperm.slane %v57, 2
    %v270 = vmul.f32 %v219, %v269
    %v271 = vmul.f32 %v223, %v269
    %v272 = vmul.f32 %v227, %v269
    %v273 = vmul.f32 %v231, %v269
    %v274 = vmul.f32 %v235, %v269
    %v275 = vmul.f32 %v239, %v269
    %v276 = vmul.f32 %v243, %v269
    %v277 = vmul.f32 %v247, %v269
    %v278 = vmul.f32 %v251, %v269
    %v279 = vmul.f32 %v255, %v269
    %v280 = vmul.f32 %v259, %v269
    %v281 = vmul.f32 %v263, %v269
    %v282 = vmul.f32 %v267, %v269
    %v283 = vadd.f32 %v204, %v270
    %v284 = vadd.f32 %v205, %v271
    %v285 = vadd.f32 %v206, %v272
    %v286 = vadd.f32 %v207, %v273
    %v287 = vadd.f32 %v208, %v274
    %v288 = vadd.f32 %v209, %v275
    %v289 = vadd.f32 %v210, %v276
    %v290 = vadd.f32 %v211, %v277
    %v291 = vadd.f32 %v212, %v278
    %v292 = vadd.f32 %v213, %v279
    %v293 = vadd.f32 %v214, %v280
    %v294 = vadd.f32 %v215, %v281
    %v295 = vadd.f32 %v216, %v282
    %296 = vset.pattern.permute.xlu0 3
    %297 = vperm.xlu0 %296, %v44
    %v298 = vpop.permute.xlu0 %297
    %300 = vset.pattern.permute.xlu0 3
    %301 = vperm.xlu0 %300, %v45
    %v302 = vpop.permute.xlu0 %301
    %304 = vset.pattern.permute.xlu0 3
    %305 = vperm.xlu0 %304, %v46
    %v306 = vpop.permute.xlu0 %305
    %308 = vset.pattern.permute.xlu0 3
    %309 = vperm.xlu0 %308, %v47
    %v310 = vpop.permute.xlu0 %309
    %312 = vset.pattern.permute.xlu0 3
    %313 = vperm.xlu0 %312, %v48
    %v314 = vpop.permute.xlu0 %313
    %316 = vset.pattern.permute.xlu0 3
    %317 = vperm.xlu0 %316, %v49
    %v318 = vpop.permute.xlu0 %317
    %320 = vset.pattern.permute.xlu0 3
    %321 = vperm.xlu0 %320, %v50
    %v322 = vpop.permute.xlu0 %321
    %324 = vset.pattern.permute.xlu0 3
    %325 = vperm.xlu0 %324, %v51
    %v326 = vpop.permute.xlu0 %325
    %328 = vset.pattern.permute.xlu0 3
    %329 = vperm.xlu0 %328, %v52
    %v330 = vpop.permute.xlu0 %329
    %332 = vset.pattern.permute.xlu0 3
    %333 = vperm.xlu0 %332, %v53
    %v334 = vpop.permute.xlu0 %333
    %336 = vset.pattern.permute.xlu0 3
    %337 = vperm.xlu0 %336, %v54
    %v338 = vpop.permute.xlu0 %337
    %340 = vset.pattern.permute.xlu0 3
    %341 = vperm.xlu0 %340, %v55
    %v342 = vpop.permute.xlu0 %341
    %344 = vset.pattern.permute.xlu0 3
    %345 = vperm.xlu0 %344, %v56
    %v346 = vpop.permute.xlu0 %345
    %v348 = vperm.slane %v57, 3
    %v349 = vmul.f32 %v298, %v348
    %v350 = vmul.f32 %v302, %v348
    %v351 = vmul.f32 %v306, %v348
    %v352 = vmul.f32 %v310, %v348
    %v353 = vmul.f32 %v314, %v348
    %v354 = vmul.f32 %v318, %v348
    %v355 = vmul.f32 %v322, %v348
    %v356 = vmul.f32 %v326, %v348
    %v357 = vmul.f32 %v330, %v348
    %v358 = vmul.f32 %v334, %v348
    %v359 = vmul.f32 %v338, %v348
    %v360 = vmul.f32 %v342, %v348
    %v361 = vmul.f32 %v346, %v348
    %v362 = vadd.f32 %v283, %v349
    %v363 = vadd.f32 %v284, %v350
    %v364 = vadd.f32 %v285, %v351
    %v365 = vadd.f32 %v286, %v352
    %v366 = vadd.f32 %v287, %v353
    %v367 = vadd.f32 %v288, %v354
    %v368 = vadd.f32 %v289, %v355
    %v369 = vadd.f32 %v290, %v356
    %v370 = vadd.f32 %v291, %v357
    %v371 = vadd.f32 %v292, %v358
    %v372 = vadd.f32 %v293, %v359
    %v373 = vadd.f32 %v294, %v360
    %v374 = vadd.f32 %v295, %v361
    %375 = vset.pattern.permute.xlu0 4
    %376 = vperm.xlu0 %375, %v44
    %v377 = vpop.permute.xlu0 %376
    %379 = vset.pattern.permute.xlu0 4
    %380 = vperm.xlu0 %379, %v45
    %v381 = vpop.permute.xlu0 %380
    %383 = vset.pattern.permute.xlu0 4
    %384 = vperm.xlu0 %383, %v46
    %v385 = vpop.permute.xlu0 %384
    %387 = vset.pattern.permute.xlu0 4
    %388 = vperm.xlu0 %387, %v47
    %v389 = vpop.permute.xlu0 %388
    %391 = vset.pattern.permute.xlu0 4
    %392 = vperm.xlu0 %391, %v48
    %v393 = vpop.permute.xlu0 %392
    %395 = vset.pattern.permute.xlu0 4
    %396 = vperm.xlu0 %395, %v49
    %v397 = vpop.permute.xlu0 %396
    %399 = vset.pattern.permute.xlu0 4
    %400 = vperm.xlu0 %399, %v50
    %v401 = vpop.permute.xlu0 %400
    %403 = vset.pattern.permute.xlu0 4
    %404 = vperm.xlu0 %403, %v51
    %v405 = vpop.permute.xlu0 %404
    %407 = vset.pattern.permute.xlu0 4
    %408 = vperm.xlu0 %407, %v52
    %v409 = vpop.permute.xlu0 %408
    %411 = vset.pattern.permute.xlu0 4
    %412 = vperm.xlu0 %411, %v53
    %v413 = vpop.permute.xlu0 %412
    %415 = vset.pattern.permute.xlu0 4
    %416 = vperm.xlu0 %415, %v54
    %v417 = vpop.permute.xlu0 %416
    %419 = vset.pattern.permute.xlu0 4
    %420 = vperm.xlu0 %419, %v55
    %v421 = vpop.permute.xlu0 %420
    %423 = vset.pattern.permute.xlu0 4
    %424 = vperm.xlu0 %423, %v56
    %v425 = vpop.permute.xlu0 %424
    %v427 = vperm.slane %v57, 4
    %v428 = vmul.f32 %v377, %v427
    %v429 = vmul.f32 %v381, %v427
    %v430 = vmul.f32 %v385, %v427
    %v431 = vmul.f32 %v389, %v427
    %v432 = vmul.f32 %v393, %v427
    %v433 = vmul.f32 %v397, %v427
    %v434 = vmul.f32 %v401, %v427
    %v435 = vmul.f32 %v405, %v427
    %v436 = vmul.f32 %v409, %v427
    %v437 = vmul.f32 %v413, %v427
    %v438 = vmul.f32 %v417, %v427
    %v439 = vmul.f32 %v421, %v427
    %v440 = vmul.f32 %v425, %v427
    %v441 = vadd.f32 %v362, %v428
    %v442 = vadd.f32 %v363, %v429
    %v443 = vadd.f32 %v364, %v430
    %v444 = vadd.f32 %v365, %v431
    %v445 = vadd.f32 %v366, %v432
    %v446 = vadd.f32 %v367, %v433
    %v447 = vadd.f32 %v368, %v434
    %v448 = vadd.f32 %v369, %v435
    %v449 = vadd.f32 %v370, %v436
    %v450 = vadd.f32 %v371, %v437
    %v451 = vadd.f32 %v372, %v438
    %v452 = vadd.f32 %v373, %v439
    %v453 = vadd.f32 %v374, %v440
    %454 = vset.pattern.permute.xlu0 5
    %455 = vperm.xlu0 %454, %v44
    %v456 = vpop.permute.xlu0 %455
    %458 = vset.pattern.permute.xlu0 5
    %459 = vperm.xlu0 %458, %v45
    %v460 = vpop.permute.xlu0 %459
    %462 = vset.pattern.permute.xlu0 5
    %463 = vperm.xlu0 %462, %v46
    %v464 = vpop.permute.xlu0 %463
    %466 = vset.pattern.permute.xlu0 5
    %467 = vperm.xlu0 %466, %v47
    %v468 = vpop.permute.xlu0 %467
    %470 = vset.pattern.permute.xlu0 5
    %471 = vperm.xlu0 %470, %v48
    %v472 = vpop.permute.xlu0 %471
    %474 = vset.pattern.permute.xlu0 5
    %475 = vperm.xlu0 %474, %v49
    %v476 = vpop.permute.xlu0 %475
    %478 = vset.pattern.permute.xlu0 5
    %479 = vperm.xlu0 %478, %v50
    %v480 = vpop.permute.xlu0 %479
    %482 = vset.pattern.permute.xlu0 5
    %483 = vperm.xlu0 %482, %v51
    %v484 = vpop.permute.xlu0 %483
    %486 = vset.pattern.permute.xlu0 5
    %487 = vperm.xlu0 %486, %v52
    %v488 = vpop.permute.xlu0 %487
    %490 = vset.pattern.permute.xlu0 5
    %491 = vperm.xlu0 %490, %v53
    %v492 = vpop.permute.xlu0 %491
    %494 = vset.pattern.permute.xlu0 5
    %495 = vperm.xlu0 %494, %v54
    %v496 = vpop.permute.xlu0 %495
    %498 = vset.pattern.permute.xlu0 5
    %499 = vperm.xlu0 %498, %v55
    %v500 = vpop.permute.xlu0 %499
    %502 = vset.pattern.permute.xlu0 5
    %503 = vperm.xlu0 %502, %v56
    %v504 = vpop.permute.xlu0 %503
    %v506 = vperm.slane %v57, 5
    %v507 = vmul.f32 %v456, %v506
    %v508 = vmul.f32 %v460, %v506
    %v509 = vmul.f32 %v464, %v506
    %v510 = vmul.f32 %v468, %v506
    %v511 = vmul.f32 %v472, %v506
    %v512 = vmul.f32 %v476, %v506
    %v513 = vmul.f32 %v480, %v506
    %v514 = vmul.f32 %v484, %v506
    %v515 = vmul.f32 %v488, %v506
    %v516 = vmul.f32 %v492, %v506
    %v517 = vmul.f32 %v496, %v506
    %v518 = vmul.f32 %v500, %v506
    %v519 = vmul.f32 %v504, %v506
    %v520 = vadd.f32 %v441, %v507
    %v521 = vadd.f32 %v442, %v508
    %v522 = vadd.f32 %v443, %v509
    %v523 = vadd.f32 %v444, %v510
    %v524 = vadd.f32 %v445, %v511
    %v525 = vadd.f32 %v446, %v512
    %v526 = vadd.f32 %v447, %v513
    %v527 = vadd.f32 %v448, %v514
    %v528 = vadd.f32 %v449, %v515
    %v529 = vadd.f32 %v450, %v516
    %v530 = vadd.f32 %v451, %v517
    %v531 = vadd.f32 %v452, %v518
    %v532 = vadd.f32 %v453, %v519
    %533 = vset.pattern.permute.xlu0 6
    %534 = vperm.xlu0 %533, %v44
    %v535 = vpop.permute.xlu0 %534
    %537 = vset.pattern.permute.xlu0 6
    %538 = vperm.xlu0 %537, %v45
    %v539 = vpop.permute.xlu0 %538
    %541 = vset.pattern.permute.xlu0 6
    %542 = vperm.xlu0 %541, %v46
    %v543 = vpop.permute.xlu0 %542
    %545 = vset.pattern.permute.xlu0 6
    %546 = vperm.xlu0 %545, %v47
    %v547 = vpop.permute.xlu0 %546
    %549 = vset.pattern.permute.xlu0 6
    %550 = vperm.xlu0 %549, %v48
    %v551 = vpop.permute.xlu0 %550
    %553 = vset.pattern.permute.xlu0 6
    %554 = vperm.xlu0 %553, %v49
    %v555 = vpop.permute.xlu0 %554
    %557 = vset.pattern.permute.xlu0 6
    %558 = vperm.xlu0 %557, %v50
    %v559 = vpop.permute.xlu0 %558
    %561 = vset.pattern.permute.xlu0 6
    %562 = vperm.xlu0 %561, %v51
    %v563 = vpop.permute.xlu0 %562
    %565 = vset.pattern.permute.xlu0 6
    %566 = vperm.xlu0 %565, %v52
    %v567 = vpop.permute.xlu0 %566
    %569 = vset.pattern.permute.xlu0 6
    %570 = vperm.xlu0 %569, %v53
    %v571 = vpop.permute.xlu0 %570
    %573 = vset.pattern.permute.xlu0 6
    %574 = vperm.xlu0 %573, %v54
    %v575 = vpop.permute.xlu0 %574
    %577 = vset.pattern.permute.xlu0 6
    %578 = vperm.xlu0 %577, %v55
    %v579 = vpop.permute.xlu0 %578
    %581 = vset.pattern.permute.xlu0 6
    %582 = vperm.xlu0 %581, %v56
    %v583 = vpop.permute.xlu0 %582
    %v585 = vperm.slane %v57, 6
    %v586 = vmul.f32 %v535, %v585
    %v587 = vmul.f32 %v539, %v585
    %v588 = vmul.f32 %v543, %v585
    %v589 = vmul.f32 %v547, %v585
    %v590 = vmul.f32 %v551, %v585
    %v591 = vmul.f32 %v555, %v585
    %v592 = vmul.f32 %v559, %v585
    %v593 = vmul.f32 %v563, %v585
    %v594 = vmul.f32 %v567, %v585
    %v595 = vmul.f32 %v571, %v585
    %v596 = vmul.f32 %v575, %v585
    %v597 = vmul.f32 %v579, %v585
    %v598 = vmul.f32 %v583, %v585
    %v599 = vadd.f32 %v520, %v586
    %v600 = vadd.f32 %v521, %v587
    %v601 = vadd.f32 %v522, %v588
    %v602 = vadd.f32 %v523, %v589
    %v603 = vadd.f32 %v524, %v590
    %v604 = vadd.f32 %v525, %v591
    %v605 = vadd.f32 %v526, %v592
    %v606 = vadd.f32 %v527, %v593
    %v607 = vadd.f32 %v528, %v594
    %v608 = vadd.f32 %v529, %v595
    %v609 = vadd.f32 %v530, %v596
    %v610 = vadd.f32 %v531, %v597
    %v611 = vadd.f32 %v532, %v598
    %612 = vset.pattern.permute.xlu0 7
    %613 = vperm.xlu0 %612, %v44
    %v614 = vpop.permute.xlu0 %613
    %616 = vset.pattern.permute.xlu0 7
    %617 = vperm.xlu0 %616, %v45
    %v618 = vpop.permute.xlu0 %617
    %620 = vset.pattern.permute.xlu0 7
    %621 = vperm.xlu0 %620, %v46
    %v622 = vpop.permute.xlu0 %621
    %624 = vset.pattern.permute.xlu0 7
    %625 = vperm.xlu0 %624, %v47
    %v626 = vpop.permute.xlu0 %625
    %628 = vset.pattern.permute.xlu0 7
    %629 = vperm.xlu0 %628, %v48
    %v630 = vpop.permute.xlu0 %629
    %632 = vset.pattern.permute.xlu0 7
    %633 = vperm.xlu0 %632, %v49
    %v634 = vpop.permute.xlu0 %633
    %636 = vset.pattern.permute.xlu0 7
    %637 = vperm.xlu0 %636, %v50
    %v638 = vpop.permute.xlu0 %637
    %640 = vset.pattern.permute.xlu0 7
    %641 = vperm.xlu0 %640, %v51
    %v642 = vpop.permute.xlu0 %641
    %644 = vset.pattern.permute.xlu0 7
    %645 = vperm.xlu0 %644, %v52
    %v646 = vpop.permute.xlu0 %645
    %648 = vset.pattern.permute.xlu0 7
    %649 = vperm.xlu0 %648, %v53
    %v650 = vpop.permute.xlu0 %649
    %652 = vset.pattern.permute.xlu0 7
    %653 = vperm.xlu0 %652, %v54
    %v654 = vpop.permute.xlu0 %653
    %656 = vset.pattern.permute.xlu0 7
    %657 = vperm.xlu0 %656, %v55
    %v658 = vpop.permute.xlu0 %657
    %660 = vset.pattern.permute.xlu0 7
    %661 = vperm.xlu0 %660, %v56
    %v662 = vpop.permute.xlu0 %661
    %v664 = vperm.slane %v57, 7
    %v665 = vmul.f32 %v614, %v664
    %v666 = vmul.f32 %v618, %v664
    %v667 = vmul.f32 %v622, %v664
    %v668 = vmul.f32 %v626, %v664
    %v669 = vmul.f32 %v630, %v664
    %v670 = vmul.f32 %v634, %v664
    %v671 = vmul.f32 %v638, %v664
    %v672 = vmul.f32 %v642, %v664
    %v673 = vmul.f32 %v646, %v664
    %v674 = vmul.f32 %v650, %v664
    %v675 = vmul.f32 %v654, %v664
    %v676 = vmul.f32 %v658, %v664
    %v677 = vmul.f32 %v662, %v664
    %v678 = vadd.f32 %v599, %v665
    %v679 = vadd.f32 %v600, %v666
    %v680 = vadd.f32 %v601, %v667
    %v681 = vadd.f32 %v602, %v668
    %v682 = vadd.f32 %v603, %v669
    %v683 = vadd.f32 %v604, %v670
    %v684 = vadd.f32 %v605, %v671
    %v685 = vadd.f32 %v606, %v672
    %v686 = vadd.f32 %v607, %v673
    %v687 = vadd.f32 %v608, %v674
    %v688 = vadd.f32 %v609, %v675
    %v689 = vadd.f32 %v610, %v676
    %v690 = vadd.f32 %v611, %v677
    %691 = vset.pattern.permute.xlu0 8
    %692 = vperm.xlu0 %691, %v44
    %v693 = vpop.permute.xlu0 %692
    %695 = vset.pattern.permute.xlu0 8
    %696 = vperm.xlu0 %695, %v45
    %v697 = vpop.permute.xlu0 %696
    %699 = vset.pattern.permute.xlu0 8
    %700 = vperm.xlu0 %699, %v46
    %v701 = vpop.permute.xlu0 %700
    %703 = vset.pattern.permute.xlu0 8
    %704 = vperm.xlu0 %703, %v47
    %v705 = vpop.permute.xlu0 %704
    %707 = vset.pattern.permute.xlu0 8
    %708 = vperm.xlu0 %707, %v48
    %v709 = vpop.permute.xlu0 %708
    %711 = vset.pattern.permute.xlu0 8
    %712 = vperm.xlu0 %711, %v49
    %v713 = vpop.permute.xlu0 %712
    %715 = vset.pattern.permute.xlu0 8
    %716 = vperm.xlu0 %715, %v50
    %v717 = vpop.permute.xlu0 %716
    %719 = vset.pattern.permute.xlu0 8
    %720 = vperm.xlu0 %719, %v51
    %v721 = vpop.permute.xlu0 %720
    %723 = vset.pattern.permute.xlu0 8
    %724 = vperm.xlu0 %723, %v52
    %v725 = vpop.permute.xlu0 %724
    %727 = vset.pattern.permute.xlu0 8
    %728 = vperm.xlu0 %727, %v53
    %v729 = vpop.permute.xlu0 %728
    %731 = vset.pattern.permute.xlu0 8
    %732 = vperm.xlu0 %731, %v54
    %v733 = vpop.permute.xlu0 %732
    %735 = vset.pattern.permute.xlu0 8
    %736 = vperm.xlu0 %735, %v55
    %v737 = vpop.permute.xlu0 %736
    %739 = vset.pattern.permute.xlu0 8
    %740 = vperm.xlu0 %739, %v56
    %v741 = vpop.permute.xlu0 %740
    %v743 = vperm.slane %v58, 0
    %v744 = vmul.f32 %v693, %v743
    %v745 = vmul.f32 %v697, %v743
    %v746 = vmul.f32 %v701, %v743
    %v747 = vmul.f32 %v705, %v743
    %v748 = vmul.f32 %v709, %v743
    %v749 = vmul.f32 %v713, %v743
    %v750 = vmul.f32 %v717, %v743
    %v751 = vmul.f32 %v721, %v743
    %v752 = vmul.f32 %v725, %v743
    %v753 = vmul.f32 %v729, %v743
    %v754 = vmul.f32 %v733, %v743
    %v755 = vmul.f32 %v737, %v743
    %v756 = vmul.f32 %v741, %v743
    %v757 = vadd.f32 %v678, %v744
    %v758 = vadd.f32 %v679, %v745
    %v759 = vadd.f32 %v680, %v746
    %v760 = vadd.f32 %v681, %v747
    %v761 = vadd.f32 %v682, %v748
    %v762 = vadd.f32 %v683, %v749
    %v763 = vadd.f32 %v684, %v750
    %v764 = vadd.f32 %v685, %v751
    %v765 = vadd.f32 %v686, %v752
    %v766 = vadd.f32 %v687, %v753
    %v767 = vadd.f32 %v688, %v754
    %v768 = vadd.f32 %v689, %v755
    %v769 = vadd.f32 %v690, %v756
    %v770 = vld [vmem:[#allocation4] sm:$0x1]
    %v772 = vperm.slane %v770, 0
    %v774 = vadd.f32 %v757, %v772
    %v775 = vadd.f32 %v758, %v772
    %v776 = vadd.f32 %v759, %v772
    %v777 = vadd.f32 %v760, %v772
    %v778 = vadd.f32 %v761, %v772
    %v779 = vadd.f32 %v762, %v772
    %v780 = vadd.f32 %v763, %v772
    %v781 = vadd.f32 %v764, %v772
    %v782 = vadd.f32 %v765, %v772
    %v783 = vadd.f32 %v766, %v772
    %v784 = vadd.f32 %v767, %v772
    %v785 = vadd.f32 %v768, %v772
    %v786 = vadd.f32 %v769, %v772
    %v787 = vmax.f32 %v774, 0.0
    %v788 = vmax.f32 %v775, 0.0
    %v789 = vmax.f32 %v776, 0.0
    %v790 = vmax.f32 %v777, 0.0
    %v791 = vmax.f32 %v778, 0.0
    %v792 = vmax.f32 %v779, 0.0
    %v793 = vmax.f32 %v780, 0.0
    %v794 = vmax.f32 %v781, 0.0
    %v795 = vmax.f32 %v782, 0.0
    %v796 = vmax.f32 %v783, 0.0
    %v797 = vmax.f32 %v784, 0.0
    %v798 = vmax.f32 %v785, 0.0
    %v799 = vmax.f32 %v786, 0.0
    %v800 = vpack.c.bf16 %v787, %v787
    %v801 = vpack.c.bf16 %v788, %v788
    %v802 = vpack.c.bf16 %v789, %v789
    %v803 = vpack.c.bf16 %v790, %v790
    %v804 = vpack.c.bf16 %v791, %v791
    %v805 = vpack.c.bf16 %v792, %v792
    %v806 = vpack.c.bf16 %v793, %v793
    %v807 = vpack.c.bf16 %v794, %v794
    %v808 = vpack.c.bf16 %v795, %v795
    %v809 = vpack.c.bf16 %v796, %v796
    %v810 = vpack.c.bf16 %v797, %v797
    %v811 = vpack.c.bf16 %v798, %v798
    %v812 = vpack.c.bf16 %v799, %v799
    %813 = vst [vmem:[%s3] sm:$0xf] %v800
    %814 = vst [vmem:[%s3 + $0x4] sm:$0xf] %v801
    %815 = vst [vmem:[%s3 + $0x8] sm:$0xf] %v802
    %816 = vst [vmem:[%s3 + $0xc] sm:$0xf] %v803
    %817 = vst [vmem:[%s3 + $0x10] sm:$0xf] %v804
    %818 = vst [vmem:[%s3 + $0x14] sm:$0xf] %v805
    %819 = vst [vmem:[%s3 + $0x18] sm:$0xf] %v806
    %820 = vst [vmem:[%s3 + $0x1c] sm:$0xf] %v807
    %821 = vst [vmem:[%s3 + $0x20] sm:$0xf] %v808
    %822 = vst [vmem:[%s3 + $0x24] sm:$0xf] %v809
    %823 = vst [vmem:[%s3 + $0x28] sm:$0xf] %v810
    %824 = vst [vmem:[%s3 + $0x2c] sm:$0xf] %v811
    %825 = vst [vmem:[%s3 + $0x30] sm:$0x1] %v812
    // Predicated region
    $region22: #{conv2d_subsampling_forward.3} parent=1 // pred_check
      _
    $region23: #{conv2d_subsampling_forward.3} parent=1 // pred_check_branch
      %827 = sbr.rel (0) target = $region25
    $region24: #{conv2d_subsampling_forward.3} parent=1 // pred_region
      _
    $region25: #{conv2d_subsampling_forward.3} parent=1 // pred_fallthru
      _
    // Predicated region
    $region26: #{conv2d_subsampling_forward.3} parent=1 // pred_check
      _
    $region27: #{conv2d_subsampling_forward.3} parent=1 // pred_check_branch
      %829 = sbr.rel (0) target = $region29
    $region28: #{conv2d_subsampling_forward.3} parent=1 // pred_region
      _
    $region29: #{conv2d_subsampling_forward.3} parent=1 // pred_fallthru
      _
    %830 = vsyncpa [#allocation3], 1
    %831 = vsyncpa [#allocation5], 1

// kernel: conv2d_subsampling_forward.5
$region0: #{conv2d_subsampling_forward.5}
  #allocation0 [shape = 'u32[]', space=smem, size = 0x4, offset = 0x4, fixed_abs, tag = 'smem constant byte address 0x4 - core index']
  #allocation1 [shape = 'u32[72,128]{1,0:T(1,128)}', space=vmem, size = 0x9000, scoped, tag = 'internal scratch']
  %s0 = inlined_call_operand.vmem [shape: bf16[2,3,384], index: 0, kind: input, shape index: {}]
  %s1 = inlined_call_operand.hbm [shape: bf16[384,128], index: 1, kind: input, shape index: {}]
  %s2 = inlined_call_operand.hbm [shape: f32[1,128], index: 2, kind: input, shape index: {}]
  %s3 = inlined_call_operand.vmem [shape: f32[3,128], index: 3, kind: input, shape index: {}]
  %s4 = inlined_call_operand.vmem [shape: f32[2,3,128], index: 4, kind: output, shape index: {}]
  %s5 = sld [smem:[#allocation0]]
  $region57: #{conv2d_subsampling_forward.5} parent=0
    _
  %s7 = ssub.s32 1, %s5
  %s8 = scalar_select 0, %s7, %s5
  $region1: #{conv2d_subsampling_forward.5} parent=0
    #allocation2 [shape = 'u8[98304]{0}', space=vmem, size = 0x18000, scoped, tag = 'input window, operand 1, single buffered']
    #allocation3 [shape = 's32[2]{0}', space=sflag, size = 0x8, scoped, tag = 'scoped memory for conv2d_subsampling_forward.5']
    #allocation4 [shape = 'u8[512]{0}', space=vmem, size = 0x400, scoped, tag = 'input window, operand 2, single buffered']
    #allocation5 [shape = 's32[1]{0}', space=sflag, size = 0x4, scoped, tag = 'scoped memory for conv2d_subsampling_forward.5']
    %9 = vsyncpa [#allocation3], 0
    %10 = vsyncpa [#allocation5], 0
    loop: start=0, step=1, limit=4
    $region2: #{conv2d_subsampling_forward.5} parent=1 // loop_pre_header
      _
    $region3: #{conv2d_subsampling_forward.5} parent=1 // loop_header
      %s12 = sphi 0, %s16
      %p13 = scmp.ge.s32.totalorder %s12, 4
      %s19 = sphi 0, %s31
      %s20 = sphi 0, %s27
      %s21 = sphi 0, %s19
      %s22 = sphi 0, %s20
      %s23 = sphi 0, %s21
      %s24 = sphi 0, %s22
      %s36 = sphi 0, %s38
      %s39 = sphi 0, %s36
      %s40 = sphi 0, %s39
      %s56 = sphi 0, %s40
      %s60 = sphi 0, %s60
      %s62 = sphi 0, %s60
      %s63 = sphi 0, %s62
      %s77 = sphi 0, %s63
      %s81 = sphi 0, %s81
      %s83 = sphi 0, %s81
      %s84 = sphi 0, %s83
      %s98 = sphi 0, %s84
      %s104 = sphi 0, %s106
      %s107 = sphi 0, %s104
      %s108 = sphi 0, %s107
      %s124 = sphi 0, %s108
      %s132 = sphi 0, %s134
      %s135 = sphi 0, %s132
      %s136 = sphi 0, %s135
      %s152 = sphi 0, %s136
    $region4: #{conv2d_subsampling_forward.5} parent=1 // loop_header_branch
      %15 = sbr.rel (%p13) target = $region8
    $region5: #{conv2d_subsampling_forward.5} parent=1 // loop_body
      %s17 = ssub.s32 %s12, 1
      %s18 = ssub.s32 %s12, 2
      %s25 = sadd.s32 1, %s20
      %p26 = scmp.ge.s32.totalorder %s25, 1
      %s27 = scalar_select %p26, 0, %s25
      %s28 = sadd.s32 1, %s19
      %s29 = scalar_select %p26, %s28, %s19
      %p30 = scmp.ge.s32.totalorder %s29, 2
      %s31 = scalar_select %p30, 0, %s29
      %s32 = ssub.s32 %s19, %s31
      %s33 = ssub.s32 %s20, %s27
      %s34 = sor.u32 %s32, %s33
      %p35 = scmp.eq.s32.totalorder %s34, 0
      %s37 = sadd.s32 %s36, 1
      %s38 = scalar_select %p35, %s36, %s37
      %p41 = pneg %p35
      %p42 = scmp.eq.s32.totalorder %s12, 1
      %p43 = por %p41, %p42
      %p44 = scmp.ne.s32.totalorder %s36, %s39
      %p45 = scmp.eq.s32.totalorder %s12, 0
      %p46 = por %p44, %p45
      %p47 = scmp.ne.s32.totalorder %s36, %s39
      %p48 = scmp.eq.s32.totalorder %s17, 1
      %p49 = por %p47, %p48
      %p50 = scmp.ne.s32.totalorder %s39, %s40
      %p51 = scmp.eq.s32.totalorder %s17, 0
      %p52 = por %p50, %p51
      %p53 = scmp.ne.s32.totalorder %s39, %s40
      %p54 = scmp.eq.s32.totalorder %s18, 1
      %p55 = por %p53, %p54
      %p57 = scmp.ne.s32.totalorder %s40, %s56
      %p58 = scmp.eq.s32.totalorder %s18, 0
      %p59 = por %p57, %p58
      %s61 = sadd.s32 %s60, 1
      %p64 = scmp.eq.s32.totalorder %s12, 1
      %p65 = scmp.ne.s32.totalorder %s60, %s62
      %p66 = scmp.eq.s32.totalorder %s12, 0
      %p67 = por %p65, %p66
      %p68 = scmp.ne.s32.totalorder %s60, %s62
      %p69 = scmp.eq.s32.totalorder %s17, 1
      %p70 = por %p68, %p69
      %p71 = scmp.ne.s32.totalorder %s62, %s63
      %p72 = scmp.eq.s32.totalorder %s17, 0
      %p73 = por %p71, %p72
      %p74 = scmp.ne.s32.totalorder %s62, %s63
      %p75 = scmp.eq.s32.totalorder %s18, 1
      %p76 = por %p74, %p75
      %p78 = scmp.ne.s32.totalorder %s63, %s77
      %p79 = scmp.eq.s32.totalorder %s18, 0
      %p80 = por %p78, %p79
      %s82 = sadd.s32 %s81, 1
      %p85 = scmp.eq.s32.totalorder %s12, 1
      %p86 = scmp.ne.s32.totalorder %s81, %s83
      %p87 = scmp.eq.s32.totalorder %s12, 0
      %p88 = por %p86, %p87
      %p89 = scmp.ne.s32.totalorder %s81, %s83
      %p90 = scmp.eq.s32.totalorder %s17, 1
      %p91 = por %p89, %p90
      %p92 = scmp.ne.s32.totalorder %s83, %s84
      %p93 = scmp.eq.s32.totalorder %s17, 0
      %p94 = por %p92, %p93
      %p95 = scmp.ne.s32.totalorder %s83, %s84
      %p96 = scmp.eq.s32.totalorder %s18, 1
      %p97 = por %p95, %p96
      %p99 = scmp.ne.s32.totalorder %s84, %s98
      %p100 = scmp.eq.s32.totalorder %s18, 0
      %p101 = por %p99, %p100
      %s102 = ssub.s32 %s20, %s27
      %p103 = scmp.eq.s32.totalorder %s102, 0
      %s105 = sadd.s32 %s104, 1
      %s106 = scalar_select %p103, %s104, %s105
      %p109 = pneg %p103
      %p110 = scmp.eq.s32.totalorder %s12, 1
      %p111 = por %p109, %p110
      %p112 = scmp.ne.s32.totalorder %s104, %s107
      %p113 = scmp.eq.s32.totalorder %s12, 0
      %p114 = por %p112, %p113
      %p115 = scmp.ne.s32.totalorder %s104, %s107
      %p116 = scmp.eq.s32.totalorder %s17, 1
      %p117 = por %p115, %p116
      %p118 = scmp.ne.s32.totalorder %s107, %s108
      %p119 = scmp.eq.s32.totalorder %s17, 0
      %p120 = por %p118, %p119
      %p121 = scmp.ne.s32.totalorder %s107, %s108
      %p122 = scmp.eq.s32.totalorder %s18, 1
      %p123 = por %p121, %p122
      %p125 = scmp.ne.s32.totalorder %s108, %s124
      %p126 = scmp.eq.s32.totalorder %s18, 0
      %p127 = por %p125, %p126
      %s128 = ssub.s32 %s19, %s31
      %s129 = ssub.s32 %s20, %s27
      %s130 = sor.u32 %s128, %s129
      %p131 = scmp.eq.s32.totalorder %s130, 0
      %s133 = sadd.s32 %s132, 1
      %s134 = scalar_select %p131, %s132, %s133
      %p137 = pneg %p131
      %p138 = scmp.eq.s32.totalorder %s12, 1
      %p139 = por %p137, %p138
      %p140 = scmp.ne.s32.totalorder %s132, %s135
      %p141 = scmp.eq.s32.totalorder %s12, 0
      %p142 = por %p140, %p141
      %p143 = scmp.ne.s32.totalorder %s132, %s135
      %p144 = scmp.eq.s32.totalorder %s17, 1
      %p145 = por %p143, %p144
      %p146 = scmp.ne.s32.totalorder %s135, %s136
      %p147 = scmp.eq.s32.totalorder %s17, 0
      %p148 = por %p146, %p147
      %p149 = scmp.ne.s32.totalorder %s135, %s136
      %p150 = scmp.eq.s32.totalorder %s18, 1
      %p151 = por %p149, %p150
      %p153 = scmp.ne.s32.totalorder %s136, %s152
      %p154 = scmp.eq.s32.totalorder %s18, 0
      %p155 = por %p153, %p154
      %p156 = scmp.le.s32.totalorder 1, %s12
      %p157 = scmp.lt.s32.totalorder %s12, 3
      %p158 = pnand %p156, %p157
      %p159 = pneg %p158
      // Predicated region
      $region9: #{conv2d_subsampling_forward.5} parent=5 // pred_check
        _
      $region10: #{conv2d_subsampling_forward.5} parent=5 // pred_check_branch
        %161 = sbr.rel (%p158) target = $region12
      $region11: #{conv2d_subsampling_forward.5} parent=5 // pred_region
        %s162 = ssub.s32 %s12, 1
        // Predicated region
        $region13: #{conv2d_subsampling_forward.5} parent=11 // pred_check
          %p163 = pneg %p73
        $region14: #{conv2d_subsampling_forward.5} parent=11 // pred_check_branch
          %165 = sbr.rel (%p163) target = $region16
        $region15: #{conv2d_subsampling_forward.5} parent=11 // pred_region
          %167 = vsyncadd [#allocation3], 0
          %s168 = sshll.u32 %s1, 4
          %s169 = int_to_ptr.hbm [resolvable:$true] %s168
          %s170 = sshll.u32 [#allocation2], 4
          %s171 = int_to_ptr.vmem [resolvable:$true] %s170
          %176 = dma.hbm_to_vmem [thread:$0]  %s169, 3072, %s171, [#allocation3], 64, 64, 4
        $region16: #{conv2d_subsampling_forward.5} parent=11 // pred_fallthru
          _
        // Predicated region
        $region17: #{conv2d_subsampling_forward.5} parent=11 // pred_check
          %p177 = pneg %p94
        $region18: #{conv2d_subsampling_forward.5} parent=11 // pred_check_branch
          %179 = sbr.rel (%p177) target = $region20
        $region19: #{conv2d_subsampling_forward.5} parent=11 // pred_region
          %181 = vsyncadd [#allocation5], 0
          %s183 = sshll.u32 %s2, 4
          %s184 = int_to_ptr.hbm [resolvable:$true] %s183
          %s185 = sshll.u32 [#allocation4], 4
          %s186 = int_to_ptr.vmem [resolvable:$true] %s185
          %188 = dma.hbm_to_vmem [thread:$0]  %s184, 16, %s186, [#allocation5]
        $region20: #{conv2d_subsampling_forward.5} parent=11 // pred_fallthru
          _
        // Predicated region
        $region21: #{conv2d_subsampling_forward.5} parent=11 // pred_check
          %p189 = pneg %p120
        $region22: #{conv2d_subsampling_forward.5} parent=11 // pred_check_branch
          %191 = sbr.rel (%p189) target = $region24
        $region23: #{conv2d_subsampling_forward.5} parent=11 // pred_region
          %p192 = scmp.lt.s32.totalorder %s22, 0
          %s193 = scalar_select %p192, %s22, 0
          %s194 = smul.addr %s193, 4
          %s195 = scalar_lea.vmem %s3, %s194
        $region24: #{conv2d_subsampling_forward.5} parent=11 // pred_fallthru
          _
      $region12: #{conv2d_subsampling_forward.5} parent=5 // pred_fallthru
        _
      %p196 = scmp.lt.s32.totalorder %s12, 2
      // Predicated region
      $region25: #{conv2d_subsampling_forward.5} parent=5 // pred_check
        %p197 = pneg %p196
      $region26: #{conv2d_subsampling_forward.5} parent=5 // pred_check_branch
        %199 = sbr.rel (%p197) target = $region28
      $region27: #{conv2d_subsampling_forward.5} parent=5 // pred_region
        // Predicated region
        $region29: #{conv2d_subsampling_forward.5} parent=27 // pred_check
          %p200 = pneg %p46
        $region30: #{conv2d_subsampling_forward.5} parent=27 // pred_check_branch
          %202 = sbr.rel (%p200) target = $region32
        $region31: #{conv2d_subsampling_forward.5} parent=27 // pred_region
          %p203 = scmp.lt.s32.totalorder %s19, 1
          %s204 = scalar_select %p203, %s19, 1
          %p205 = scmp.lt.s32.totalorder %s20, 0
          %s206 = scalar_select %p205, %s20, 0
          %s207 = smul.addr %s206, 3
          %s208 = smul.addr %s204, 3
          %s209 = sadd.s32 %s207, %s208
          %s210 = smul.addr %s209, 2
          %s211 = scalar_lea.vmem %s0, %s210
        $region32: #{conv2d_subsampling_forward.5} parent=27 // pred_fallthru
          _
      $region28: #{conv2d_subsampling_forward.5} parent=5 // pred_fallthru
        _
      %p212 = scmp.le.s32.totalorder 1, %s12
      %p213 = scmp.lt.s32.totalorder %s12, 3
      %p214 = pnand %p212, %p213
      %p215 = pneg %p214
      // Predicated region
      $region33: #{conv2d_subsampling_forward.5} parent=5 // pred_check
        _
      $region34: #{conv2d_subsampling_forward.5} parent=5 // pred_check_branch
        %217 = sbr.rel (%p214) target = $region36
      $region35: #{conv2d_subsampling_forward.5} parent=5 // pred_region
        %s218 = ssub.s32 %s12, 1
        // Predicated region
        $region37: #{conv2d_subsampling_forward.5} parent=35 // pred_check
          %p219 = pneg %p73
        $region38: #{conv2d_subsampling_forward.5} parent=35 // pred_check_branch
          %221 = sbr.rel (%p219) target = $region40
        $region39: #{conv2d_subsampling_forward.5} parent=35 // pred_region
          %223 = dma.done [#allocation3], 3072
        $region40: #{conv2d_subsampling_forward.5} parent=35 // pred_fallthru
          _
        // Predicated region
        $region41: #{conv2d_subsampling_forward.5} parent=35 // pred_check
          %p224 = pneg %p94
        $region42: #{conv2d_subsampling_forward.5} parent=35 // pred_check_branch
          %226 = sbr.rel (%p224) target = $region44
        $region43: #{conv2d_subsampling_forward.5} parent=35 // pred_region
          %228 = dma.done [#allocation5], 16
        $region44: #{conv2d_subsampling_forward.5} parent=35 // pred_fallthru
          _
        %p229 = scmp.lt.s32.totalorder %s21, 1
        %s230 = scalar_select %p229, %s21, 1
        %p231 = scmp.lt.s32.totalorder %s22, 0
        %s232 = scalar_select %p231, %s22, 0
        %s233 = smul.addr %s232, 3
        %s234 = smul.addr %s230, 3
        %s235 = sadd.s32 %s233, %s234
        %s236 = smul.addr %s235, 2
        %s237 = scalar_lea.vmem %s0, %s236
        %p238 = pneg %p52
        %p239 = pneg %p49
        %p240 = pneg %p73
        %p241 = pneg %p70
        %p242 = pneg %p94
        %p243 = pneg %p91
        %p244 = scmp.lt.s32.totalorder %s22, 0
        %s245 = scalar_select %p244, %s22, 0
        %s246 = smul.addr %s245, 4
        %s247 = scalar_lea.vmem %s3, %s246
        %p248 = pneg %p120
        %p249 = pneg %p117
        %p250 = pneg %p148
        %p251 = pneg %p145
        %p252 = scmp.lt.s32.totalorder %s21, 1
        %s253 = scalar_select %p252, %s21, 1
        %p254 = scmp.lt.s32.totalorder %s22, 0
        %s255 = scalar_select %p254, %s22, 0
        %s256 = sadd.s32 %s255, %s253
        %s257 = smul.addr %s256, 4
        %s258 = scalar_lea.vmem %s4, %s257
        %p259 = scmp.lt.s32.totalorder %s21, 1
        %s260 = scalar_select %p259, %s21, 1
        %p261 = scmp.lt.s32.totalorder %s22, 0
        %s262 = scalar_select %p261, %s22, 0
        %s263 = smul.addr %s262, 3
        %s264 = smul.addr %s260, 3
        %s265 = sadd.s32 %s263, %s264
        %s266 = smul.addr %s265, 2
        %s267 = scalar_lea.vmem %s0, %s266
        %p268 = scmp.lt.s32.totalorder %s22, 0
        %s269 = scalar_select %p268, %s22, 0
        %s270 = smul.addr %s269, 4
        %s271 = scalar_lea.vmem %s3, %s270
        %p272 = scmp.lt.s32.totalorder %s21, 1
        %s273 = scalar_select %p272, %s21, 1
        %p274 = scmp.lt.s32.totalorder %s22, 0
        %s275 = scalar_select %p274, %s22, 0
        %s276 = sadd.s32 %s275, %s273
        %s277 = smul.addr %s276, 4
        %s278 = scalar_lea.vmem %s4, %s277
        %v279 = vld [vmem:[%s267] sm:$0x3f]
        %v280 = vld [vmem:[#allocation2] sm:$0xf]
        %v281 = vld [vmem:[#allocation2 + $0x4] sm:$0xf]
        %v282 = vld [vmem:[#allocation2 + $0x8] sm:$0xf]
        %v283 = vld [vmem:[#allocation2 + $0xc] sm:$0xf]
        %v284 = vld [vmem:[#allocation2 + $0x10] sm:$0xf]
        %v285 = vld [vmem:[#allocation2 + $0x14] sm:$0xf]
        %v286 = vld [vmem:[#allocation2 + $0x18] sm:$0xf]
        %v287 = vld [vmem:[#allocation2 + $0x1c] sm:$0xf]
        %v288 = vld [vmem:[#allocation2 + $0x20] sm:$0xf]
        %v289 = vld [vmem:[#allocation2 + $0x24] sm:$0xf]
        %v290 = vld [vmem:[#allocation2 + $0x28] sm:$0xf]
        %v291 = vld [vmem:[#allocation2 + $0x2c] sm:$0xf]
        %v292 = vld [vmem:[#allocation2 + $0x30] sm:$0xf]
        %v293 = vld [vmem:[#allocation2 + $0x34] sm:$0xf]
        %v294 = vld [vmem:[#allocation2 + $0x38] sm:$0xf]
        %v295 = vld [vmem:[#allocation2 + $0x3c] sm:$0xf]
        %v296 = vld [vmem:[#allocation2 + $0x40] sm:$0xf]
        %v297 = vld [vmem:[#allocation2 + $0x44] sm:$0xf]
        %v298 = vld [vmem:[#allocation2 + $0x48] sm:$0xf]
        %v299 = vld [vmem:[#allocation2 + $0x4c] sm:$0xf]
        %v300 = vld [vmem:[#allocation2 + $0x50] sm:$0xf]
        %v301 = vld [vmem:[#allocation2 + $0x54] sm:$0xf]
        %v302 = vld [vmem:[#allocation2 + $0x58] sm:$0xf]
        %v303 = vld [vmem:[#allocation2 + $0x5c] sm:$0xf]
        %v304 = vld [vmem:[#allocation2 + $0x60] sm:$0xf]
        %v305 = vld [vmem:[#allocation2 + $0x64] sm:$0xf]
        %v306 = vld [vmem:[#allocation2 + $0x68] sm:$0xf]
        %v307 = vld [vmem:[#allocation2 + $0x6c] sm:$0xf]
        %v308 = vld [vmem:[#allocation2 + $0x70] sm:$0xf]
        %v309 = vld [vmem:[#allocation2 + $0x74] sm:$0xf]
        %v310 = vld [vmem:[#allocation2 + $0x78] sm:$0xf]
        %v311 = vld [vmem:[#allocation2 + $0x7c] sm:$0xf]
        %v312 = vld [vmem:[#allocation2 + $0x80] sm:$0xf]
        %v313 = vld [vmem:[#allocation2 + $0x84] sm:$0xf]
        %v314 = vld [vmem:[#allocation2 + $0x88] sm:$0xf]
        %v315 = vld [vmem:[#allocation2 + $0x8c] sm:$0xf]
        %v316 = vld [vmem:[#allocation2 + $0x90] sm:$0xf]
        %v317 = vld [vmem:[#allocation2 + $0x94] sm:$0xf]
        %v318 = vld [vmem:[#allocation2 + $0x98] sm:$0xf]
        %v319 = vld [vmem:[#allocation2 + $0x9c] sm:$0xf]
        %v320 = vld [vmem:[#allocation2 + $0xa0] sm:$0xf]
        %v321 = vld [vmem:[#allocation2 + $0xa4] sm:$0xf]
        %v322 = vld [vmem:[#allocation2 + $0xa8] sm:$0xf]
        %v323 = vld [vmem:[#allocation2 + $0xac] sm:$0xf]
        %v324 = vld [vmem:[#allocation2 + $0xb0] sm:$0xf]
        %v325 = vld [vmem:[#allocation2 + $0xb4] sm:$0xf]
        %v326 = vld [vmem:[#allocation2 + $0xb8] sm:$0xf]
        %v327 = vld [vmem:[#allocation2 + $0xbc] sm:$0xf]
        %v328 = vld [vmem:[#allocation4] sm:$0x1]
        %v330 = vperm.slane %v328, 0
        %333 = vst [vmem:[#allocation1] ss:$4 sm:$0xff] %v279
        %v334 = vld.sshfl [vmem:[#allocation1] sm:$0xff pattern:$0x73625140]
        %v335 = vld.sshfl [vmem:[#allocation1 + $0x8] sm:$0xff pattern:$0x73625140]
        %v336 = vld.sshfl [vmem:[#allocation1 + $0x10] sm:$0xff pattern:$0x73625140]
        %v388 = vunpack.c.l.b16 %v280
        %v389 = vunpack.c.l.b16 %v281
        %v390 = vunpack.c.l.b16 %v282
        %v391 = vunpack.c.l.b16 %v283
        %v392 = vunpack.c.l.b16 %v284
        %v393 = vunpack.c.l.b16 %v285
        %v394 = vunpack.c.l.b16 %v286
        %v395 = vunpack.c.l.b16 %v287
        %v396 = vunpack.c.l.b16 %v288
        %v397 = vunpack.c.l.b16 %v289
        %v398 = vunpack.c.l.b16 %v290
        %v399 = vunpack.c.l.b16 %v291
        %v400 = vunpack.c.l.b16 %v292
        %v401 = vunpack.c.l.b16 %v293
        %v402 = vunpack.c.l.b16 %v294
        %v403 = vunpack.c.l.b16 %v295
        %v404 = vunpack.c.l.b16 %v296
        %v405 = vunpack.c.l.b16 %v297
        %v406 = vunpack.c.l.b16 %v298
        %v407 = vunpack.c.l.b16 %v299
        %v408 = vunpack.c.l.b16 %v300
        %v409 = vunpack.c.l.b16 %v301
        %v410 = vunpack.c.l.b16 %v302
        %v411 = vunpack.c.l.b16 %v303
        %v412 = vunpack.c.l.b16 %v304
        %v413 = vunpack.c.l.b16 %v305
        %v414 = vunpack.c.l.b16 %v306
        %v415 = vunpack.c.l.b16 %v307
        %v416 = vunpack.c.l.b16 %v308
        %v417 = vunpack.c.l.b16 %v309
        %v418 = vunpack.c.l.b16 %v310
        %v419 = vunpack.c.l.b16 %v311
        %v420 = vunpack.c.l.b16 %v312
        %v421 = vunpack.c.l.b16 %v313
        %v422 = vunpack.c.l.b16 %v314
        %v423 = vunpack.c.l.b16 %v315
        %v424 = vunpack.c.l.b16 %v316
        %v425 = vunpack.c.l.b16 %v317
        %v426 = vunpack.c.l.b16 %v318
        %v427 = vunpack.c.l.b16 %v319
        %v428 = vunpack.c.l.b16 %v320
        %v429 = vunpack.c.l.b16 %v321
        %v430 = vunpack.c.l.b16 %v322
        %v431 = vunpack.c.l.b16 %v323
        %v432 = vunpack.c.l.b16 %v324
        %v433 = vunpack.c.l.b16 %v325
        %v434 = vunpack.c.l.b16 %v326
        %v435 = vunpack.c.l.b16 %v327
        %v436 = vpack.c.b16 %v389, %v388
        %v437 = vpack.c.b16 %v391, %v390
        %v438 = vpack.c.b16 %v393, %v392
        %v439 = vpack.c.b16 %v395, %v394
        %v440 = vpack.c.b16 %v397, %v396
        %v441 = vpack.c.b16 %v399, %v398
        %v442 = vpack.c.b16 %v401, %v400
        %v443 = vpack.c.b16 %v403, %v402
        %v444 = vpack.c.b16 %v405, %v404
        %v445 = vpack.c.b16 %v407, %v406
        %v446 = vpack.c.b16 %v409, %v408
        %v447 = vpack.c.b16 %v411, %v410
        %v448 = vpack.c.b16 %v413, %v412
        %v449 = vpack.c.b16 %v415, %v414
        %v450 = vpack.c.b16 %v417, %v416
        %v451 = vpack.c.b16 %v419, %v418
        %v452 = vpack.c.b16 %v421, %v420
        %v453 = vpack.c.b16 %v423, %v422
        %v454 = vpack.c.b16 %v425, %v424
        %v455 = vpack.c.b16 %v427, %v426
        %v456 = vpack.c.b16 %v429, %v428
        %v457 = vpack.c.b16 %v431, %v430
        %v458 = vpack.c.b16 %v433, %v432
        %v459 = vpack.c.b16 %v435, %v434
        %484 = vmatpush.bf16.msra.mxu0 %v443
        %485 = vmatpush.bf16.msra.mxu0 %v442
        %486 = vmatpush.bf16.msra.mxu0 %v441
        %487 = vmatpush.bf16.msra.mxu0 %v440
        %488 = vmatpush.bf16.msra.mxu0 %v439
        %489 = vmatpush.bf16.msra.mxu0 %v438
        %490 = vmatpush.bf16.msra.mxu0 %v437
        %491 = vmatpush.bf16.msra.mxu0 %v436
        %492 = vmatmul.bf16.gmra.mxu0 %v334
        %v493 = vpop.f32.mrf.mxu0
        %v494 = vadd.f32 %v330, %v493
        %v495 = vpop.f32.mrf.mxu0
        %496 = vdwg.mxu0
        %497 = vmatpush.bf16.msra.mxu0 %v451
        %498 = vmatpush.bf16.msra.mxu0 %v450
        %499 = vmatpush.bf16.msra.mxu0 %v449
        %500 = vmatpush.bf16.msra.mxu0 %v448
        %501 = vmatpush.bf16.msra.mxu0 %v447
        %502 = vmatpush.bf16.msra.mxu0 %v446
        %503 = vmatpush.bf16.msra.mxu0 %v445
        %504 = vmatpush.bf16.msra.mxu0 %v444
        %505 = vmatmul.bf16.gmra.mxu0 %v335
        %v506 = vpop.f32.mrf.mxu0
        %v507 = vadd.f32 %v494, %v506
        %v508 = vpop.f32.mrf.mxu0
        %509 = vdwg.mxu0
        %510 = vmatpush.bf16.msra.mxu0 %v459
        %511 = vmatpush.bf16.msra.mxu0 %v458
        %512 = vmatpush.bf16.msra.mxu0 %v457
        %513 = vmatpush.bf16.msra.mxu0 %v456
        %514 = vmatpush.bf16.msra.mxu0 %v455
        %515 = vmatpush.bf16.msra.mxu0 %v454
        %516 = vmatpush.bf16.msra.mxu0 %v453
        %517 = vmatpush.bf16.msra.mxu0 %v452
        %518 = vmatmul.bf16.gmra.mxu0 %v336
        %v519 = vpop.f32.mrf.mxu0
        %v520 = vadd.f32 %v507, %v519
        %v521 = vpop.f32.mrf.mxu0
        %522 = vdwg.mxu0
        %v523 = vld [vmem:[%s271] sm:$0x7]
        %v524 = vadd.f32 %v520, %v523
        %525 = vst [vmem:[%s278] sm:$0x7] %v524
        %p526 = scmp.lt.s32.totalorder %s21, 1
        %s527 = scalar_select %p526, %s21, 1
        %p528 = scmp.lt.s32.totalorder %s22, 0
        %s529 = scalar_select %p528, %s22, 0
        %s530 = sadd.s32 %s529, %s527
        %s531 = smul.addr %s530, 4
        %s532 = scalar_lea.vmem %s4, %s531
        // Predicated region
        $region45: #{conv2d_subsampling_forward.5} parent=35 // pred_check
          %p533 = pneg %p145
        $region46: #{conv2d_subsampling_forward.5} parent=35 // pred_check_branch
          %535 = sbr.rel (%p533) target = $region48
        $region47: #{conv2d_subsampling_forward.5} parent=35 // pred_region
          _
        $region48: #{conv2d_subsampling_forward.5} parent=35 // pred_fallthru
          _
      $region36: #{conv2d_subsampling_forward.5} parent=5 // pred_fallthru
        _
      %p536 = scmp.le.s32.totalorder 2, %s12
      // Predicated region
      $region49: #{conv2d_subsampling_forward.5} parent=5 // pred_check
        %p537 = pneg %p536
      $region50: #{conv2d_subsampling_forward.5} parent=5 // pred_check_branch
        %539 = sbr.rel (%p537) target = $region52
      $region51: #{conv2d_subsampling_forward.5} parent=5 // pred_region
        %s540 = ssub.s32 %s12, 2
        // Predicated region
        $region53: #{conv2d_subsampling_forward.5} parent=51 // pred_check
          %p541 = pneg %p151
        $region54: #{conv2d_subsampling_forward.5} parent=51 // pred_check_branch
          %543 = sbr.rel (%p541) target = $region56
        $region55: #{conv2d_subsampling_forward.5} parent=51 // pred_region
          %p544 = scmp.lt.s32.totalorder %s23, 1
          %s545 = scalar_select %p544, %s23, 1
          %p546 = scmp.lt.s32.totalorder %s24, 0
          %s547 = scalar_select %p546, %s24, 0
          %s548 = sadd.s32 %s547, %s545
          %s549 = smul.addr %s548, 4
          %s550 = scalar_lea.vmem %s4, %s549
        $region56: #{conv2d_subsampling_forward.5} parent=51 // pred_fallthru
          _
      $region52: #{conv2d_subsampling_forward.5} parent=5 // pred_fallthru
        _
    $region6: #{conv2d_subsampling_forward.5} parent=1 // loop_footer
      %s16 = sadd.s32 1, %s12
    $region7: #{conv2d_subsampling_forward.5} parent=1 // loop_footer_branch
      %11 = sbr.rel target = $region3
    $region8: #{conv2d_subsampling_forward.5} parent=1 // loop_exit
      _
    %551 = vsyncpa [#allocation3], 1
    %s552 = scalar_lea.sflag [#allocation3], 1
    %553 = vsyncpa %s552, 1
    %554 = vsyncpa [#allocation5], 1

// kernel: conv2d_subsampling_forward.4
$region0: #{conv2d_subsampling_forward.4}
  #allocation0 [shape = 'u32[]', space=smem, size = 0x4, offset = 0x4, fixed_abs, tag = 'smem constant byte address 0x4 - core index']
  #allocation1 [shape = 'u32[72,128]{1,0:T(1,128)}', space=vmem, size = 0x9000, scoped, tag = 'internal scratch']
  %s0 = inlined_call_operand.vmem [shape: bf16[18,128], index: 0, kind: input, shape index: {}]
  %s1 = inlined_call_operand.vmem [shape: bf16[18,128], index: 1, kind: input, shape index: {}]
  %s2 = inlined_call_operand.vmem [shape: bf16[18,128], index: 2, kind: input, shape index: {}]
  %s3 = inlined_call_operand.vmem [shape: bf16[18,128], index: 3, kind: input, shape index: {}]
  %s4 = inlined_call_operand.vmem [shape: bf16[18,128], index: 4, kind: input, shape index: {}]
  %s5 = inlined_call_operand.vmem [shape: bf16[18,128], index: 5, kind: input, shape index: {}]
  %s6 = inlined_call_operand.vmem [shape: bf16[18,128], index: 6, kind: input, shape index: {}]
  %s7 = inlined_call_operand.vmem [shape: bf16[18,128], index: 7, kind: input, shape index: {}]
  %s8 = inlined_call_operand.vmem [shape: bf16[18,128], index: 8, kind: input, shape index: {}]
  %s9 = inlined_call_operand.hbm [shape: bf16[9,128,128], index: 9, kind: input, shape index: {}]
  %s10 = inlined_call_operand.hbm [shape: f32[1,128], index: 10, kind: input, shape index: {}]
  %s11 = inlined_call_operand.vmem [shape: bf16[18,128], index: 11, kind: output, shape index: {}]
  %s12 = sld [smem:[#allocation0]]
  $region62: #{conv2d_subsampling_forward.4} parent=0
    _
  %s14 = ssub.s32 1, %s12
  %s15 = scalar_select 0, %s14, %s12
  $region1: #{conv2d_subsampling_forward.4} parent=0
    #allocation2 [shape = 'u8[294912]{0}', space=vmem, size = 0x48000, scoped, tag = 'input window, operand 9, single buffered']
    #allocation3 [shape = 's32[1]{0}', space=sflag, size = 0x4, scoped, tag = 'scoped memory for conv2d_subsampling_forward.4']
    #allocation4 [shape = 'u8[512]{0}', space=vmem, size = 0x400, scoped, tag = 'input window, operand 10, single buffered']
    #allocation5 [shape = 's32[1]{0}', space=sflag, size = 0x4, scoped, tag = 'scoped memory for conv2d_subsampling_forward.4']
    %16 = vsyncpa [#allocation3], 0
    %17 = vsyncpa [#allocation5], 0
    // Predicated region
    $region2: #{conv2d_subsampling_forward.4} parent=1 // pred_check
      _
    $region3: #{conv2d_subsampling_forward.4} parent=1 // pred_check_branch
      %19 = sbr.rel (0) target = $region5
    $region4: #{conv2d_subsampling_forward.4} parent=1 // pred_region
      _
    $region5: #{conv2d_subsampling_forward.4} parent=1 // pred_fallthru
      _
    // Predicated region
    $region6: #{conv2d_subsampling_forward.4} parent=1 // pred_check
      _
    $region7: #{conv2d_subsampling_forward.4} parent=1 // pred_check_branch
      %21 = sbr.rel (0) target = $region9
    $region8: #{conv2d_subsampling_forward.4} parent=1 // pred_region
      _
    $region9: #{conv2d_subsampling_forward.4} parent=1 // pred_fallthru
      _
    // Predicated region
    $region10: #{conv2d_subsampling_forward.4} parent=1 // pred_check
      _
    $region11: #{conv2d_subsampling_forward.4} parent=1 // pred_check_branch
      %23 = sbr.rel (0) target = $region13
    $region12: #{conv2d_subsampling_forward.4} parent=1 // pred_region
      _
    $region13: #{conv2d_subsampling_forward.4} parent=1 // pred_fallthru
      _
    // Predicated region
    $region14: #{conv2d_subsampling_forward.4} parent=1 // pred_check
      _
    $region15: #{conv2d_subsampling_forward.4} parent=1 // pred_check_branch
      %25 = sbr.rel (0) target = $region17
    $region16: #{conv2d_subsampling_forward.4} parent=1 // pred_region
      _
    $region17: #{conv2d_subsampling_forward.4} parent=1 // pred_fallthru
      _
    // Predicated region
    $region18: #{conv2d_subsampling_forward.4} parent=1 // pred_check
      _
    $region19: #{conv2d_subsampling_forward.4} parent=1 // pred_check_branch
      %27 = sbr.rel (0) target = $region21
    $region20: #{conv2d_subsampling_forward.4} parent=1 // pred_region
      _
    $region21: #{conv2d_subsampling_forward.4} parent=1 // pred_fallthru
      _
    // Predicated region
    $region22: #{conv2d_subsampling_forward.4} parent=1 // pred_check
      _
    $region23: #{conv2d_subsampling_forward.4} parent=1 // pred_check_branch
      %29 = sbr.rel (0) target = $region25
    $region24: #{conv2d_subsampling_forward.4} parent=1 // pred_region
      _
    $region25: #{conv2d_subsampling_forward.4} parent=1 // pred_fallthru
      _
    // Predicated region
    $region26: #{conv2d_subsampling_forward.4} parent=1 // pred_check
      _
    $region27: #{conv2d_subsampling_forward.4} parent=1 // pred_check_branch
      %31 = sbr.rel (0) target = $region29
    $region28: #{conv2d_subsampling_forward.4} parent=1 // pred_region
      _
    $region29: #{conv2d_subsampling_forward.4} parent=1 // pred_fallthru
      _
    // Predicated region
    $region30: #{conv2d_subsampling_forward.4} parent=1 // pred_check
      _
    $region31: #{conv2d_subsampling_forward.4} parent=1 // pred_check_branch
      %33 = sbr.rel (0) target = $region33
    $region32: #{conv2d_subsampling_forward.4} parent=1 // pred_region
      _
    $region33: #{conv2d_subsampling_forward.4} parent=1 // pred_fallthru
      _
    // Predicated region
    $region34: #{conv2d_subsampling_forward.4} parent=1 // pred_check
      _
    $region35: #{conv2d_subsampling_forward.4} parent=1 // pred_check_branch
      %35 = sbr.rel (0) target = $region37
    $region36: #{conv2d_subsampling_forward.4} parent=1 // pred_region
      _
    $region37: #{conv2d_subsampling_forward.4} parent=1 // pred_fallthru
      _
    // Predicated region
    $region38: #{conv2d_subsampling_forward.4} parent=1 // pred_check
      _
    $region39: #{conv2d_subsampling_forward.4} parent=1 // pred_check_branch
      %37 = sbr.rel (0) target = $region41
    $region40: #{conv2d_subsampling_forward.4} parent=1 // pred_region
      %39 = vsyncadd [#allocation3], 0
      %s40 = sshll.u32 %s9, 4
      %s41 = int_to_ptr.hbm [resolvable:$true] %s40
      %s42 = sshll.u32 [#allocation2], 4
      %s43 = int_to_ptr.vmem [resolvable:$true] %s42
      %48 = dma.hbm_to_vmem [thread:$0]  %s41, 9216, %s43, [#allocation3], 64, 64, 4
    $region41: #{conv2d_subsampling_forward.4} parent=1 // pred_fallthru
      _
    // Predicated region
    $region42: #{conv2d_subsampling_forward.4} parent=1 // pred_check
      _
    $region43: #{conv2d_subsampling_forward.4} parent=1 // pred_check_branch
      %50 = sbr.rel (0) target = $region45
    $region44: #{conv2d_subsampling_forward.4} parent=1 // pred_region
      %52 = vsyncadd [#allocation5], 0
      %s54 = sshll.u32 %s10, 4
      %s55 = int_to_ptr.hbm [resolvable:$true] %s54
      %s56 = sshll.u32 [#allocation4], 4
      %s57 = int_to_ptr.vmem [resolvable:$true] %s56
      %59 = dma.hbm_to_vmem [thread:$0]  %s55, 16, %s57, [#allocation5]
    $region45: #{conv2d_subsampling_forward.4} parent=1 // pred_fallthru
      _
    // Predicated region
    $region46: #{conv2d_subsampling_forward.4} parent=1 // pred_check
      _
    $region47: #{conv2d_subsampling_forward.4} parent=1 // pred_check_branch
      %61 = sbr.rel (0) target = $region49
    $region48: #{conv2d_subsampling_forward.4} parent=1 // pred_region
      %63 = dma.done [#allocation3], 9216
    $region49: #{conv2d_subsampling_forward.4} parent=1 // pred_fallthru
      _
    // Predicated region
    $region50: #{conv2d_subsampling_forward.4} parent=1 // pred_check
      _
    $region51: #{conv2d_subsampling_forward.4} parent=1 // pred_check_branch
      %65 = sbr.rel (0) target = $region53
    $region52: #{conv2d_subsampling_forward.4} parent=1 // pred_region
      %67 = dma.done [#allocation5], 16
    $region53: #{conv2d_subsampling_forward.4} parent=1 // pred_fallthru
      _
    %v68 = vld [vmem:[%s0] sm:$0xf]
    %v69 = vld [vmem:[%s0 + $0x4] sm:$0xf]
    %v70 = vld [vmem:[%s0 + $0x8] sm:$0x1]
    %v71 = vld [vmem:[#allocation2] sm:$0xf]
    %v72 = vld [vmem:[#allocation2 + $0x4] sm:$0xf]
    %v73 = vld [vmem:[#allocation2 + $0x8] sm:$0xf]
    %v74 = vld [vmem:[#allocation2 + $0xc] sm:$0xf]
    %v75 = vld [vmem:[#allocation2 + $0x10] sm:$0xf]
    %v76 = vld [vmem:[#allocation2 + $0x14] sm:$0xf]
    %v77 = vld [vmem:[#allocation2 + $0x18] sm:$0xf]
    %v78 = vld [vmem:[#allocation2 + $0x1c] sm:$0xf]
    %v79 = vld [vmem:[#allocation2 + $0x20] sm:$0xf]
    %v80 = vld [vmem:[#allocation2 + $0x24] sm:$0xf]
    %v81 = vld [vmem:[#allocation2 + $0x28] sm:$0xf]
    %v82 = vld [vmem:[#allocation2 + $0x2c] sm:$0xf]
    %v83 = vld [vmem:[#allocation2 + $0x30] sm:$0xf]
    %v84 = vld [vmem:[#allocation2 + $0x34] sm:$0xf]
    %v85 = vld [vmem:[#allocation2 + $0x38] sm:$0xf]
    %v86 = vld [vmem:[#allocation2 + $0x3c] sm:$0xf]
    %v87 = vld [vmem:[%s1] sm:$0xf]
    %v88 = vld [vmem:[%s1 + $0x4] sm:$0xf]
    %v89 = vld [vmem:[%s1 + $0x8] sm:$0x1]
    %s90 = scalar_lea.vmem [#allocation2], 64
    %v91 = vld [vmem:[%s90] sm:$0xf]
    %v92 = vld [vmem:[%s90 + $0x4] sm:$0xf]
    %v93 = vld [vmem:[%s90 + $0x8] sm:$0xf]
    %v94 = vld [vmem:[%s90 + $0xc] sm:$0xf]
    %v95 = vld [vmem:[%s90 + $0x10] sm:$0xf]
    %v96 = vld [vmem:[%s90 + $0x14] sm:$0xf]
    %v97 = vld [vmem:[%s90 + $0x18] sm:$0xf]
    %v98 = vld [vmem:[%s90 + $0x1c] sm:$0xf]
    %v99 = vld [vmem:[%s90 + $0x20] sm:$0xf]
    %v100 = vld [vmem:[%s90 + $0x24] sm:$0xf]
    %v101 = vld [vmem:[%s90 + $0x28] sm:$0xf]
    %v102 = vld [vmem:[%s90 + $0x2c] sm:$0xf]
    %v103 = vld [vmem:[%s90 + $0x30] sm:$0xf]
    %v104 = vld [vmem:[%s90 + $0x34] sm:$0xf]
    %v105 = vld [vmem:[%s90 + $0x38] sm:$0xf]
    %v106 = vld [vmem:[%s90 + $0x3c] sm:$0xf]
    %v110 = vunpack.c.l.b16 %v87
    %v111 = vunpack.c.l.b16 %v88
    %v112 = vunpack.c.l.b16 %v89
    %v113 = vpack.c.b16 %v111, %v110
    %v114 = vpack.c.b16 %v112, %v112
    %v133 = vunpack.c.l.b16 %v91
    %v134 = vunpack.c.l.b16 %v92
    %v135 = vunpack.c.l.b16 %v93
    %v136 = vunpack.c.l.b16 %v94
    %v137 = vunpack.c.l.b16 %v95
    %v138 = vunpack.c.l.b16 %v96
    %v139 = vunpack.c.l.b16 %v97
    %v140 = vunpack.c.l.b16 %v98
    %v141 = vunpack.c.l.b16 %v99
    %v142 = vunpack.c.l.b16 %v100
    %v143 = vunpack.c.l.b16 %v101
    %v144 = vunpack.c.l.b16 %v102
    %v145 = vunpack.c.l.b16 %v103
    %v146 = vunpack.c.l.b16 %v104
    %v147 = vunpack.c.l.b16 %v105
    %v148 = vunpack.c.l.b16 %v106
    %v149 = vpack.c.b16 %v134, %v133
    %v150 = vpack.c.b16 %v136, %v135
    %v151 = vpack.c.b16 %v138, %v137
    %v152 = vpack.c.b16 %v140, %v139
    %v153 = vpack.c.b16 %v142, %v141
    %v154 = vpack.c.b16 %v144, %v143
    %v155 = vpack.c.b16 %v146, %v145
    %v156 = vpack.c.b16 %v148, %v147
    %165 = vmatpush.bf16.msra.mxu0 %v156
    %166 = vmatpush.bf16.msra.mxu0 %v155
    %167 = vmatpush.bf16.msra.mxu0 %v154
    %168 = vmatpush.bf16.msra.mxu0 %v153
    %169 = vmatpush.bf16.msra.mxu0 %v152
    %170 = vmatpush.bf16.msra.mxu0 %v151
    %171 = vmatpush.bf16.msra.mxu0 %v150
    %172 = vmatpush.bf16.msra.mxu0 %v149
    %173 = vmatmul.bf16.gmra.mxu0 %v113
    %v174 = vpop.f32.mrf.mxu0
    %v175 = vadd.f32 0.0, %v174
    %v176 = vpop.f32.mrf.mxu0
    %v177 = vadd.f32 0.0, %v176
    %178 = vmatmul.bf16.gmra.mxu0 %v114
    %v179 = vpop.f32.mrf.mxu0
    %v180 = vadd.f32 0.0, %v179
    %v181 = vpop.f32.mrf.mxu0
    %182 = vdwg.mxu0
    %v186 = vunpack.c.l.b16 %v68
    %v187 = vunpack.c.l.b16 %v69
    %v188 = vunpack.c.l.b16 %v70
    %v189 = vpack.c.b16 %v187, %v186
    %v190 = vpack.c.b16 %v188, %v188
    %v209 = vunpack.c.l.b16 %v71
    %v210 = vunpack.c.l.b16 %v72
    %v211 = vunpack.c.l.b16 %v73
    %v212 = vunpack.c.l.b16 %v74
    %v213 = vunpack.c.l.b16 %v75
    %v214 = vunpack.c.l.b16 %v76
    %v215 = vunpack.c.l.b16 %v77
    %v216 = vunpack.c.l.b16 %v78
    %v217 = vunpack.c.l.b16 %v79
    %v218 = vunpack.c.l.b16 %v80
    %v219 = vunpack.c.l.b16 %v81
    %v220 = vunpack.c.l.b16 %v82
    %v221 = vunpack.c.l.b16 %v83
    %v222 = vunpack.c.l.b16 %v84
    %v223 = vunpack.c.l.b16 %v85
    %v224 = vunpack.c.l.b16 %v86
    %v225 = vpack.c.b16 %v210, %v209
    %v226 = vpack.c.b16 %v212, %v211
    %v227 = vpack.c.b16 %v214, %v213
    %v228 = vpack.c.b16 %v216, %v215
    %v229 = vpack.c.b16 %v218, %v217
    %v230 = vpack.c.b16 %v220, %v219
    %v231 = vpack.c.b16 %v222, %v221
    %v232 = vpack.c.b16 %v224, %v223
    %241 = vmatpush.bf16.msra.mxu0 %v232
    %242 = vmatpush.bf16.msra.mxu0 %v231
    %243 = vmatpush.bf16.msra.mxu0 %v230
    %244 = vmatpush.bf16.msra.mxu0 %v229
    %245 = vmatpush.bf16.msra.mxu0 %v228
    %246 = vmatpush.bf16.msra.mxu0 %v227
    %247 = vmatpush.bf16.msra.mxu0 %v226
    %248 = vmatpush.bf16.msra.mxu0 %v225
    %249 = vmatmul.bf16.gmra.mxu0 %v189
    %v250 = vpop.f32.mrf.mxu0
    %v251 = vadd.f32 %v175, %v250
    %v252 = vpop.f32.mrf.mxu0
    %v253 = vadd.f32 %v177, %v252
    %254 = vmatmul.bf16.gmra.mxu0 %v190
    %v255 = vpop.f32.mrf.mxu0
    %v256 = vadd.f32 %v180, %v255
    %v257 = vpop.f32.mrf.mxu0
    %258 = vdwg.mxu0
    %v259 = vld [vmem:[%s2] sm:$0xf]
    %v260 = vld [vmem:[%s2 + $0x4] sm:$0xf]
    %v261 = vld [vmem:[%s2 + $0x8] sm:$0x1]
    %s262 = scalar_lea.vmem [#allocation2], 128
    %v263 = vld [vmem:[%s262] sm:$0xf]
    %v264 = vld [vmem:[%s262 + $0x4] sm:$0xf]
    %v265 = vld [vmem:[%s262 + $0x8] sm:$0xf]
    %v266 = vld [vmem:[%s262 + $0xc] sm:$0xf]
    %v267 = vld [vmem:[%s262 + $0x10] sm:$0xf]
    %v268 = vld [vmem:[%s262 + $0x14] sm:$0xf]
    %v269 = vld [vmem:[%s262 + $0x18] sm:$0xf]
    %v270 = vld [vmem:[%s262 + $0x1c] sm:$0xf]
    %v271 = vld [vmem:[%s262 + $0x20] sm:$0xf]
    %v272 = vld [vmem:[%s262 + $0x24] sm:$0xf]
    %v273 = vld [vmem:[%s262 + $0x28] sm:$0xf]
    %v274 = vld [vmem:[%s262 + $0x2c] sm:$0xf]
    %v275 = vld [vmem:[%s262 + $0x30] sm:$0xf]
    %v276 = vld [vmem:[%s262 + $0x34] sm:$0xf]
    %v277 = vld [vmem:[%s262 + $0x38] sm:$0xf]
    %v278 = vld [vmem:[%s262 + $0x3c] sm:$0xf]
    %v282 = vunpack.c.l.b16 %v259
    %v283 = vunpack.c.l.b16 %v260
    %v284 = vunpack.c.l.b16 %v261
    %v285 = vpack.c.b16 %v283, %v282
    %v286 = vpack.c.b16 %v284, %v284
    %v305 = vunpack.c.l.b16 %v263
    %v306 = vunpack.c.l.b16 %v264
    %v307 = vunpack.c.l.b16 %v265
    %v308 = vunpack.c.l.b16 %v266
    %v309 = vunpack.c.l.b16 %v267
    %v310 = vunpack.c.l.b16 %v268
    %v311 = vunpack.c.l.b16 %v269
    %v312 = vunpack.c.l.b16 %v270
    %v313 = vunpack.c.l.b16 %v271
    %v314 = vunpack.c.l.b16 %v272
    %v315 = vunpack.c.l.b16 %v273
    %v316 = vunpack.c.l.b16 %v274
    %v317 = vunpack.c.l.b16 %v275
    %v318 = vunpack.c.l.b16 %v276
    %v319 = vunpack.c.l.b16 %v277
    %v320 = vunpack.c.l.b16 %v278
    %v321 = vpack.c.b16 %v306, %v305
    %v322 = vpack.c.b16 %v308, %v307
    %v323 = vpack.c.b16 %v310, %v309
    %v324 = vpack.c.b16 %v312, %v311
    %v325 = vpack.c.b16 %v314, %v313
    %v326 = vpack.c.b16 %v316, %v315
    %v327 = vpack.c.b16 %v318, %v317
    %v328 = vpack.c.b16 %v320, %v319
    %337 = vmatpush.bf16.msra.mxu0 %v328
    %338 = vmatpush.bf16.msra.mxu0 %v327
    %339 = vmatpush.bf16.msra.mxu0 %v326
    %340 = vmatpush.bf16.msra.mxu0 %v325
    %341 = vmatpush.bf16.msra.mxu0 %v324
    %342 = vmatpush.bf16.msra.mxu0 %v323
    %343 = vmatpush.bf16.msra.mxu0 %v322
    %344 = vmatpush.bf16.msra.mxu0 %v321
    %345 = vmatmul.bf16.gmra.mxu0 %v285
    %v346 = vpop.f32.mrf.mxu0
    %v347 = vadd.f32 0.0, %v346
    %v348 = vpop.f32.mrf.mxu0
    %v349 = vadd.f32 0.0, %v348
    %350 = vmatmul.bf16.gmra.mxu0 %v286
    %v351 = vpop.f32.mrf.mxu0
    %v352 = vadd.f32 0.0, %v351
    %v353 = vpop.f32.mrf.mxu0
    %354 = vdwg.mxu0
    %v355 = vadd.f32 %v251, %v347
    %v356 = vadd.f32 %v253, %v349
    %v357 = vadd.f32 %v256, %v352
    %v358 = vld [vmem:[%s3] sm:$0xf]
    %v359 = vld [vmem:[%s3 + $0x4] sm:$0xf]
    %v360 = vld [vmem:[%s3 + $0x8] sm:$0x1]
    %s361 = scalar_lea.vmem [#allocation2], 192
    %v362 = vld [vmem:[%s361] sm:$0xf]
    %v363 = vld [vmem:[%s361 + $0x4] sm:$0xf]
    %v364 = vld [vmem:[%s361 + $0x8] sm:$0xf]
    %v365 = vld [vmem:[%s361 + $0xc] sm:$0xf]
    %v366 = vld [vmem:[%s361 + $0x10] sm:$0xf]
    %v367 = vld [vmem:[%s361 + $0x14] sm:$0xf]
    %v368 = vld [vmem:[%s361 + $0x18] sm:$0xf]
    %v369 = vld [vmem:[%s361 + $0x1c] sm:$0xf]
    %v370 = vld [vmem:[%s361 + $0x20] sm:$0xf]
    %v371 = vld [vmem:[%s361 + $0x24] sm:$0xf]
    %v372 = vld [vmem:[%s361 + $0x28] sm:$0xf]
    %v373 = vld [vmem:[%s361 + $0x2c] sm:$0xf]
    %v374 = vld [vmem:[%s361 + $0x30] sm:$0xf]
    %v375 = vld [vmem:[%s361 + $0x34] sm:$0xf]
    %v376 = vld [vmem:[%s361 + $0x38] sm:$0xf]
    %v377 = vld [vmem:[%s361 + $0x3c] sm:$0xf]
    %v381 = vunpack.c.l.b16 %v358
    %v382 = vunpack.c.l.b16 %v359
    %v383 = vunpack.c.l.b16 %v360
    %v384 = vpack.c.b16 %v382, %v381
    %v385 = vpack.c.b16 %v383, %v383
    %v404 = vunpack.c.l.b16 %v362
    %v405 = vunpack.c.l.b16 %v363
    %v406 = vunpack.c.l.b16 %v364
    %v407 = vunpack.c.l.b16 %v365
    %v408 = vunpack.c.l.b16 %v366
    %v409 = vunpack.c.l.b16 %v367
    %v410 = vunpack.c.l.b16 %v368
    %v411 = vunpack.c.l.b16 %v369
    %v412 = vunpack.c.l.b16 %v370
    %v413 = vunpack.c.l.b16 %v371
    %v414 = vunpack.c.l.b16 %v372
    %v415 = vunpack.c.l.b16 %v373
    %v416 = vunpack.c.l.b16 %v374
    %v417 = vunpack.c.l.b16 %v375
    %v418 = vunpack.c.l.b16 %v376
    %v419 = vunpack.c.l.b16 %v377
    %v420 = vpack.c.b16 %v405, %v404
    %v421 = vpack.c.b16 %v407, %v406
    %v422 = vpack.c.b16 %v409, %v408
    %v423 = vpack.c.b16 %v411, %v410
    %v424 = vpack.c.b16 %v413, %v412
    %v425 = vpack.c.b16 %v415, %v414
    %v426 = vpack.c.b16 %v417, %v416
    %v427 = vpack.c.b16 %v419, %v418
    %436 = vmatpush.bf16.msra.mxu0 %v427
    %437 = vmatpush.bf16.msra.mxu0 %v426
    %438 = vmatpush.bf16.msra.mxu0 %v425
    %439 = vmatpush.bf16.msra.mxu0 %v424
    %440 = vmatpush.bf16.msra.mxu0 %v423
    %441 = vmatpush.bf16.msra.mxu0 %v422
    %442 = vmatpush.bf16.msra.mxu0 %v421
    %443 = vmatpush.bf16.msra.mxu0 %v420
    %444 = vmatmul.bf16.gmra.mxu0 %v384
    %v445 = vpop.f32.mrf.mxu0
    %v446 = vadd.f32 0.0, %v445
    %v447 = vpop.f32.mrf.mxu0
    %v448 = vadd.f32 0.0, %v447
    %449 = vmatmul.bf16.gmra.mxu0 %v385
    %v450 = vpop.f32.mrf.mxu0
    %v451 = vadd.f32 0.0, %v450
    %v452 = vpop.f32.mrf.mxu0
    %453 = vdwg.mxu0
    %v454 = vadd.f32 %v355, %v446
    %v455 = vadd.f32 %v356, %v448
    %v456 = vadd.f32 %v357, %v451
    %v457 = vld [vmem:[%s4] sm:$0xf]
    %v458 = vld [vmem:[%s4 + $0x4] sm:$0xf]
    %v459 = vld [vmem:[%s4 + $0x8] sm:$0x1]
    %s460 = scalar_lea.vmem [#allocation2], 256
    %v461 = vld [vmem:[%s460] sm:$0xf]
    %v462 = vld [vmem:[%s460 + $0x4] sm:$0xf]
    %v463 = vld [vmem:[%s460 + $0x8] sm:$0xf]
    %v464 = vld [vmem:[%s460 + $0xc] sm:$0xf]
    %v465 = vld [vmem:[%s460 + $0x10] sm:$0xf]
    %v466 = vld [vmem:[%s460 + $0x14] sm:$0xf]
    %v467 = vld [vmem:[%s460 + $0x18] sm:$0xf]
    %v468 = vld [vmem:[%s460 + $0x1c] sm:$0xf]
    %v469 = vld [vmem:[%s460 + $0x20] sm:$0xf]
    %v470 = vld [vmem:[%s460 + $0x24] sm:$0xf]
    %v471 = vld [vmem:[%s460 + $0x28] sm:$0xf]
    %v472 = vld [vmem:[%s460 + $0x2c] sm:$0xf]
    %v473 = vld [vmem:[%s460 + $0x30] sm:$0xf]
    %v474 = vld [vmem:[%s460 + $0x34] sm:$0xf]
    %v475 = vld [vmem:[%s460 + $0x38] sm:$0xf]
    %v476 = vld [vmem:[%s460 + $0x3c] sm:$0xf]
    %v480 = vunpack.c.l.b16 %v457
    %v481 = vunpack.c.l.b16 %v458
    %v482 = vunpack.c.l.b16 %v459
    %v483 = vpack.c.b16 %v481, %v480
    %v484 = vpack.c.b16 %v482, %v482
    %v503 = vunpack.c.l.b16 %v461
    %v504 = vunpack.c.l.b16 %v462
    %v505 = vunpack.c.l.b16 %v463
    %v506 = vunpack.c.l.b16 %v464
    %v507 = vunpack.c.l.b16 %v465
    %v508 = vunpack.c.l.b16 %v466
    %v509 = vunpack.c.l.b16 %v467
    %v510 = vunpack.c.l.b16 %v468
    %v511 = vunpack.c.l.b16 %v469
    %v512 = vunpack.c.l.b16 %v470
    %v513 = vunpack.c.l.b16 %v471
    %v514 = vunpack.c.l.b16 %v472
    %v515 = vunpack.c.l.b16 %v473
    %v516 = vunpack.c.l.b16 %v474
    %v517 = vunpack.c.l.b16 %v475
    %v518 = vunpack.c.l.b16 %v476
    %v519 = vpack.c.b16 %v504, %v503
    %v520 = vpack.c.b16 %v506, %v505
    %v521 = vpack.c.b16 %v508, %v507
    %v522 = vpack.c.b16 %v510, %v509
    %v523 = vpack.c.b16 %v512, %v511
    %v524 = vpack.c.b16 %v514, %v513
    %v525 = vpack.c.b16 %v516, %v515
    %v526 = vpack.c.b16 %v518, %v517
    %535 = vmatpush.bf16.msra.mxu0 %v526
    %536 = vmatpush.bf16.msra.mxu0 %v525
    %537 = vmatpush.bf16.msra.mxu0 %v524
    %538 = vmatpush.bf16.msra.mxu0 %v523
    %539 = vmatpush.bf16.msra.mxu0 %v522
    %540 = vmatpush.bf16.msra.mxu0 %v521
    %541 = vmatpush.bf16.msra.mxu0 %v520
    %542 = vmatpush.bf16.msra.mxu0 %v519
    %543 = vmatmul.bf16.gmra.mxu0 %v483
    %v544 = vpop.f32.mrf.mxu0
    %v545 = vadd.f32 0.0, %v544
    %v546 = vpop.f32.mrf.mxu0
    %v547 = vadd.f32 0.0, %v546
    %548 = vmatmul.bf16.gmra.mxu0 %v484
    %v549 = vpop.f32.mrf.mxu0
    %v550 = vadd.f32 0.0, %v549
    %v551 = vpop.f32.mrf.mxu0
    %552 = vdwg.mxu0
    %v553 = vadd.f32 %v454, %v545
    %v554 = vadd.f32 %v455, %v547
    %v555 = vadd.f32 %v456, %v550
    %v556 = vld [vmem:[%s5] sm:$0xf]
    %v557 = vld [vmem:[%s5 + $0x4] sm:$0xf]
    %v558 = vld [vmem:[%s5 + $0x8] sm:$0x1]
    %s559 = scalar_lea.vmem [#allocation2], 320
    %v560 = vld [vmem:[%s559] sm:$0xf]
    %v561 = vld [vmem:[%s559 + $0x4] sm:$0xf]
    %v562 = vld [vmem:[%s559 + $0x8] sm:$0xf]
    %v563 = vld [vmem:[%s559 + $0xc] sm:$0xf]
    %v564 = vld [vmem:[%s559 + $0x10] sm:$0xf]
    %v565 = vld [vmem:[%s559 + $0x14] sm:$0xf]
    %v566 = vld [vmem:[%s559 + $0x18] sm:$0xf]
    %v567 = vld [vmem:[%s559 + $0x1c] sm:$0xf]
    %v568 = vld [vmem:[%s559 + $0x20] sm:$0xf]
    %v569 = vld [vmem:[%s559 + $0x24] sm:$0xf]
    %v570 = vld [vmem:[%s559 + $0x28] sm:$0xf]
    %v571 = vld [vmem:[%s559 + $0x2c] sm:$0xf]
    %v572 = vld [vmem:[%s559 + $0x30] sm:$0xf]
    %v573 = vld [vmem:[%s559 + $0x34] sm:$0xf]
    %v574 = vld [vmem:[%s559 + $0x38] sm:$0xf]
    %v575 = vld [vmem:[%s559 + $0x3c] sm:$0xf]
    %v579 = vunpack.c.l.b16 %v556
    %v580 = vunpack.c.l.b16 %v557
    %v581 = vunpack.c.l.b16 %v558
    %v582 = vpack.c.b16 %v580, %v579
    %v583 = vpack.c.b16 %v581, %v581
    %v602 = vunpack.c.l.b16 %v560
    %v603 = vunpack.c.l.b16 %v561
    %v604 = vunpack.c.l.b16 %v562
    %v605 = vunpack.c.l.b16 %v563
    %v606 = vunpack.c.l.b16 %v564
    %v607 = vunpack.c.l.b16 %v565
    %v608 = vunpack.c.l.b16 %v566
    %v609 = vunpack.c.l.b16 %v567
    %v610 = vunpack.c.l.b16 %v568
    %v611 = vunpack.c.l.b16 %v569
    %v612 = vunpack.c.l.b16 %v570
    %v613 = vunpack.c.l.b16 %v571
    %v614 = vunpack.c.l.b16 %v572
    %v615 = vunpack.c.l.b16 %v573
    %v616 = vunpack.c.l.b16 %v574
    %v617 = vunpack.c.l.b16 %v575
    %v618 = vpack.c.b16 %v603, %v602
    %v619 = vpack.c.b16 %v605, %v604
    %v620 = vpack.c.b16 %v607, %v606
    %v621 = vpack.c.b16 %v609, %v608
    %v622 = vpack.c.b16 %v611, %v610
    %v623 = vpack.c.b16 %v613, %v612
    %v624 = vpack.c.b16 %v615, %v614
    %v625 = vpack.c.b16 %v617, %v616
    %634 = vmatpush.bf16.msra.mxu0 %v625
    %635 = vmatpush.bf16.msra.mxu0 %v624
    %636 = vmatpush.bf16.msra.mxu0 %v623
    %637 = vmatpush.bf16.msra.mxu0 %v622
    %638 = vmatpush.bf16.msra.mxu0 %v621
    %639 = vmatpush.bf16.msra.mxu0 %v620
    %640 = vmatpush.bf16.msra.mxu0 %v619
    %641 = vmatpush.bf16.msra.mxu0 %v618
    %642 = vmatmul.bf16.gmra.mxu0 %v582
    %v643 = vpop.f32.mrf.mxu0
    %v644 = vadd.f32 0.0, %v643
    %v645 = vpop.f32.mrf.mxu0
    %v646 = vadd.f32 0.0, %v645
    %647 = vmatmul.bf16.gmra.mxu0 %v583
    %v648 = vpop.f32.mrf.mxu0
    %v649 = vadd.f32 0.0, %v648
    %v650 = vpop.f32.mrf.mxu0
    %651 = vdwg.mxu0
    %v652 = vadd.f32 %v553, %v644
    %v653 = vadd.f32 %v554, %v646
    %v654 = vadd.f32 %v555, %v649
    %v655 = vld [vmem:[%s6] sm:$0xf]
    %v656 = vld [vmem:[%s6 + $0x4] sm:$0xf]
    %v657 = vld [vmem:[%s6 + $0x8] sm:$0x1]
    %s658 = scalar_lea.vmem [#allocation2], 384
    %v659 = vld [vmem:[%s658] sm:$0xf]
    %v660 = vld [vmem:[%s658 + $0x4] sm:$0xf]
    %v661 = vld [vmem:[%s658 + $0x8] sm:$0xf]
    %v662 = vld [vmem:[%s658 + $0xc] sm:$0xf]
    %v663 = vld [vmem:[%s658 + $0x10] sm:$0xf]
    %v664 = vld [vmem:[%s658 + $0x14] sm:$0xf]
    %v665 = vld [vmem:[%s658 + $0x18] sm:$0xf]
    %v666 = vld [vmem:[%s658 + $0x1c] sm:$0xf]
    %v667 = vld [vmem:[%s658 + $0x20] sm:$0xf]
    %v668 = vld [vmem:[%s658 + $0x24] sm:$0xf]
    %v669 = vld [vmem:[%s658 + $0x28] sm:$0xf]
    %v670 = vld [vmem:[%s658 + $0x2c] sm:$0xf]
    %v671 = vld [vmem:[%s658 + $0x30] sm:$0xf]
    %v672 = vld [vmem:[%s658 + $0x34] sm:$0xf]
    %v673 = vld [vmem:[%s658 + $0x38] sm:$0xf]
    %v674 = vld [vmem:[%s658 + $0x3c] sm:$0xf]
    %v678 = vunpack.c.l.b16 %v655
    %v679 = vunpack.c.l.b16 %v656
    %v680 = vunpack.c.l.b16 %v657
    %v681 = vpack.c.b16 %v679, %v678
    %v682 = vpack.c.b16 %v680, %v680
    %v701 = vunpack.c.l.b16 %v659
    %v702 = vunpack.c.l.b16 %v660
    %v703 = vunpack.c.l.b16 %v661
    %v704 = vunpack.c.l.b16 %v662
    %v705 = vunpack.c.l.b16 %v663
    %v706 = vunpack.c.l.b16 %v664
    %v707 = vunpack.c.l.b16 %v665
    %v708 = vunpack.c.l.b16 %v666
    %v709 = vunpack.c.l.b16 %v667
    %v710 = vunpack.c.l.b16 %v668
    %v711 = vunpack.c.l.b16 %v669
    %v712 = vunpack.c.l.b16 %v670
    %v713 = vunpack.c.l.b16 %v671
    %v714 = vunpack.c.l.b16 %v672
    %v715 = vunpack.c.l.b16 %v673
    %v716 = vunpack.c.l.b16 %v674
    %v717 = vpack.c.b16 %v702, %v701
    %v718 = vpack.c.b16 %v704, %v703
    %v719 = vpack.c.b16 %v706, %v705
    %v720 = vpack.c.b16 %v708, %v707
    %v721 = vpack.c.b16 %v710, %v709
    %v722 = vpack.c.b16 %v712, %v711
    %v723 = vpack.c.b16 %v714, %v713
    %v724 = vpack.c.b16 %v716, %v715
    %733 = vmatpush.bf16.msra.mxu0 %v724
    %734 = vmatpush.bf16.msra.mxu0 %v723
    %735 = vmatpush.bf16.msra.mxu0 %v722
    %736 = vmatpush.bf16.msra.mxu0 %v721
    %737 = vmatpush.bf16.msra.mxu0 %v720
    %738 = vmatpush.bf16.msra.mxu0 %v719
    %739 = vmatpush.bf16.msra.mxu0 %v718
    %740 = vmatpush.bf16.msra.mxu0 %v717
    %741 = vmatmul.bf16.gmra.mxu0 %v681
    %v742 = vpop.f32.mrf.mxu0
    %v743 = vadd.f32 0.0, %v742
    %v744 = vpop.f32.mrf.mxu0
    %v745 = vadd.f32 0.0, %v744
    %746 = vmatmul.bf16.gmra.mxu0 %v682
    %v747 = vpop.f32.mrf.mxu0
    %v748 = vadd.f32 0.0, %v747
    %v749 = vpop.f32.mrf.mxu0
    %750 = vdwg.mxu0
    %v751 = vadd.f32 %v652, %v743
    %v752 = vadd.f32 %v653, %v745
    %v753 = vadd.f32 %v654, %v748
    %v754 = vld [vmem:[%s7] sm:$0xf]
    %v755 = vld [vmem:[%s7 + $0x4] sm:$0xf]
    %v756 = vld [vmem:[%s7 + $0x8] sm:$0x1]
    %s757 = scalar_lea.vmem [#allocation2], 448
    %v758 = vld [vmem:[%s757] sm:$0xf]
    %v759 = vld [vmem:[%s757 + $0x4] sm:$0xf]
    %v760 = vld [vmem:[%s757 + $0x8] sm:$0xf]
    %v761 = vld [vmem:[%s757 + $0xc] sm:$0xf]
    %v762 = vld [vmem:[%s757 + $0x10] sm:$0xf]
    %v763 = vld [vmem:[%s757 + $0x14] sm:$0xf]
    %v764 = vld [vmem:[%s757 + $0x18] sm:$0xf]
    %v765 = vld [vmem:[%s757 + $0x1c] sm:$0xf]
    %v766 = vld [vmem:[%s757 + $0x20] sm:$0xf]
    %v767 = vld [vmem:[%s757 + $0x24] sm:$0xf]
    %v768 = vld [vmem:[%s757 + $0x28] sm:$0xf]
    %v769 = vld [vmem:[%s757 + $0x2c] sm:$0xf]
    %v770 = vld [vmem:[%s757 + $0x30] sm:$0xf]
    %v771 = vld [vmem:[%s757 + $0x34] sm:$0xf]
    %v772 = vld [vmem:[%s757 + $0x38] sm:$0xf]
    %v773 = vld [vmem:[%s757 + $0x3c] sm:$0xf]
    %v777 = vunpack.c.l.b16 %v754
    %v778 = vunpack.c.l.b16 %v755
    %v779 = vunpack.c.l.b16 %v756
    %v780 = vpack.c.b16 %v778, %v777
    %v781 = vpack.c.b16 %v779, %v779
    %v800 = vunpack.c.l.b16 %v758
    %v801 = vunpack.c.l.b16 %v759
    %v802 = vunpack.c.l.b16 %v760
    %v803 = vunpack.c.l.b16 %v761
    %v804 = vunpack.c.l.b16 %v762
    %v805 = vunpack.c.l.b16 %v763
    %v806 = vunpack.c.l.b16 %v764
    %v807 = vunpack.c.l.b16 %v765
    %v808 = vunpack.c.l.b16 %v766
    %v809 = vunpack.c.l.b16 %v767
    %v810 = vunpack.c.l.b16 %v768
    %v811 = vunpack.c.l.b16 %v769
    %v812 = vunpack.c.l.b16 %v770
    %v813 = vunpack.c.l.b16 %v771
    %v814 = vunpack.c.l.b16 %v772
    %v815 = vunpack.c.l.b16 %v773
    %v816 = vpack.c.b16 %v801, %v800
    %v817 = vpack.c.b16 %v803, %v802
    %v818 = vpack.c.b16 %v805, %v804
    %v819 = vpack.c.b16 %v807, %v806
    %v820 = vpack.c.b16 %v809, %v808
    %v821 = vpack.c.b16 %v811, %v810
    %v822 = vpack.c.b16 %v813, %v812
    %v823 = vpack.c.b16 %v815, %v814
    %832 = vmatpush.bf16.msra.mxu0 %v823
    %833 = vmatpush.bf16.msra.mxu0 %v822
    %834 = vmatpush.bf16.msra.mxu0 %v821
    %835 = vmatpush.bf16.msra.mxu0 %v820
    %836 = vmatpush.bf16.msra.mxu0 %v819
    %837 = vmatpush.bf16.msra.mxu0 %v818
    %838 = vmatpush.bf16.msra.mxu0 %v817
    %839 = vmatpush.bf16.msra.mxu0 %v816
    %840 = vmatmul.bf16.gmra.mxu0 %v780
    %v841 = vpop.f32.mrf.mxu0
    %v842 = vadd.f32 0.0, %v841
    %v843 = vpop.f32.mrf.mxu0
    %v844 = vadd.f32 0.0, %v843
    %845 = vmatmul.bf16.gmra.mxu0 %v781
    %v846 = vpop.f32.mrf.mxu0
    %v847 = vadd.f32 0.0, %v846
    %v848 = vpop.f32.mrf.mxu0
    %849 = vdwg.mxu0
    %v850 = vadd.f32 %v751, %v842
    %v851 = vadd.f32 %v752, %v844
    %v852 = vadd.f32 %v753, %v847
    %v853 = vld [vmem:[%s8] sm:$0xf]
    %v854 = vld [vmem:[%s8 + $0x4] sm:$0xf]
    %v855 = vld [vmem:[%s8 + $0x8] sm:$0x1]
    %s856 = scalar_lea.vmem [#allocation2], 512
    %v857 = vld [vmem:[%s856] sm:$0xf]
    %v858 = vld [vmem:[%s856 + $0x4] sm:$0xf]
    %v859 = vld [vmem:[%s856 + $0x8] sm:$0xf]
    %v860 = vld [vmem:[%s856 + $0xc] sm:$0xf]
    %v861 = vld [vmem:[%s856 + $0x10] sm:$0xf]
    %v862 = vld [vmem:[%s856 + $0x14] sm:$0xf]
    %v863 = vld [vmem:[%s856 + $0x18] sm:$0xf]
    %v864 = vld [vmem:[%s856 + $0x1c] sm:$0xf]
    %v865 = vld [vmem:[%s856 + $0x20] sm:$0xf]
    %v866 = vld [vmem:[%s856 + $0x24] sm:$0xf]
    %v867 = vld [vmem:[%s856 + $0x28] sm:$0xf]
    %v868 = vld [vmem:[%s856 + $0x2c] sm:$0xf]
    %v869 = vld [vmem:[%s856 + $0x30] sm:$0xf]
    %v870 = vld [vmem:[%s856 + $0x34] sm:$0xf]
    %v871 = vld [vmem:[%s856 + $0x38] sm:$0xf]
    %v872 = vld [vmem:[%s856 + $0x3c] sm:$0xf]
    %v876 = vunpack.c.l.b16 %v853
    %v877 = vunpack.c.l.b16 %v854
    %v878 = vunpack.c.l.b16 %v855
    %v879 = vpack.c.b16 %v877, %v876
    %v880 = vpack.c.b16 %v878, %v878
    %v899 = vunpack.c.l.b16 %v857
    %v900 = vunpack.c.l.b16 %v858
    %v901 = vunpack.c.l.b16 %v859
    %v902 = vunpack.c.l.b16 %v860
    %v903 = vunpack.c.l.b16 %v861
    %v904 = vunpack.c.l.b16 %v862
    %v905 = vunpack.c.l.b16 %v863
    %v906 = vunpack.c.l.b16 %v864
    %v907 = vunpack.c.l.b16 %v865
    %v908 = vunpack.c.l.b16 %v866
    %v909 = vunpack.c.l.b16 %v867
    %v910 = vunpack.c.l.b16 %v868
    %v911 = vunpack.c.l.b16 %v869
    %v912 = vunpack.c.l.b16 %v870
    %v913 = vunpack.c.l.b16 %v871
    %v914 = vunpack.c.l.b16 %v872
    %v915 = vpack.c.b16 %v900, %v899
    %v916 = vpack.c.b16 %v902, %v901
    %v917 = vpack.c.b16 %v904, %v903
    %v918 = vpack.c.b16 %v906, %v905
    %v919 = vpack.c.b16 %v908, %v907
    %v920 = vpack.c.b16 %v910, %v909
    %v921 = vpack.c.b16 %v912, %v911
    %v922 = vpack.c.b16 %v914, %v913
    %931 = vmatpush.bf16.msra.mxu0 %v922
    %932 = vmatpush.bf16.msra.mxu0 %v921
    %933 = vmatpush.bf16.msra.mxu0 %v920
    %934 = vmatpush.bf16.msra.mxu0 %v919
    %935 = vmatpush.bf16.msra.mxu0 %v918
    %936 = vmatpush.bf16.msra.mxu0 %v917
    %937 = vmatpush.bf16.msra.mxu0 %v916
    %938 = vmatpush.bf16.msra.mxu0 %v915
    %939 = vmatmul.bf16.gmra.mxu0 %v879
    %v940 = vpop.f32.mrf.mxu0
    %v941 = vadd.f32 0.0, %v940
    %v942 = vpop.f32.mrf.mxu0
    %v943 = vadd.f32 0.0, %v942
    %944 = vmatmul.bf16.gmra.mxu0 %v880
    %v945 = vpop.f32.mrf.mxu0
    %v946 = vadd.f32 0.0, %v945
    %v947 = vpop.f32.mrf.mxu0
    %948 = vdwg.mxu0
    %v949 = vadd.f32 %v850, %v941
    %v950 = vadd.f32 %v851, %v943
    %v951 = vadd.f32 %v852, %v946
    %v952 = vld [vmem:[#allocation4] sm:$0x1]
    %v954 = vperm.slane %v952, 0
    %v956 = vadd.f32 %v949, %v954
    %v957 = vadd.f32 %v950, %v954
    %v958 = vadd.f32 %v951, %v954
    %v959 = vmax.f32 %v956, 0.0
    %v960 = vmax.f32 %v957, 0.0
    %v961 = vmax.f32 %v958, 0.0
    %v962 = vpack.c.bf16 %v959, %v959
    %v963 = vpack.c.bf16 %v960, %v960
    %v964 = vpack.c.bf16 %v961, %v961
    %965 = vst [vmem:[%s11] sm:$0xf] %v962
    %966 = vst [vmem:[%s11 + $0x4] sm:$0xf] %v963
    %967 = vst [vmem:[%s11 + $0x8] sm:$0x1] %v964
    // Predicated region
    $region54: #{conv2d_subsampling_forward.4} parent=1 // pred_check
      _
    $region55: #{conv2d_subsampling_forward.4} parent=1 // pred_check_branch
      %969 = sbr.rel (0) target = $region57
    $region56: #{conv2d_subsampling_forward.4} parent=1 // pred_region
      _
    $region57: #{conv2d_subsampling_forward.4} parent=1 // pred_fallthru
      _
    // Predicated region
    $region58: #{conv2d_subsampling_forward.4} parent=1 // pred_check
      _
    $region59: #{conv2d_subsampling_forward.4} parent=1 // pred_check_branch
      %971 = sbr.rel (0) target = $region61
    $region60: #{conv2d_subsampling_forward.4} parent=1 // pred_region
      _
    $region61: #{conv2d_subsampling_forward.4} parent=1 // pred_fallthru
      _
    %972 = vsyncpa [#allocation3], 1
    %973 = vsyncpa [#allocation5], 1

</llo_original>
